<compile_context>
chip_gen: v7x
topology: tpu7x:2x2x1
jax: 0.10.0
libtpu: 0.0.40
codegen_flags: <defaults>
</compile_context>

<pallas_src>
import functools

import jax
import jax.numpy as jnp
from jax.experimental import pallas as pl
from jax.experimental.pallas import tpu as pltpu


def _triplet_adp_kernel(xr_ref, xc_ref, sqr_ref, sql_ref, tr_ref, tl_ref,
                        out_ref, *, alpha, gamma):
    x_i = xr_ref[...]                       # (TM, D)  matmul dtype (f32 or bf16)
    x_all = xc_ref[...]                     # (N,  D)  matmul dtype

    # Contract over the lane axis of both operands: no x.T is ever materialized.
    prec = jax.lax.Precision.HIGHEST if x_i.dtype == jnp.float32 else None
    gram = jax.lax.dot_general(
        x_i, x_all,
        dimension_numbers=(((1,), (1,)), ((), ())),
        precision=prec,
        preferred_element_type=jnp.float32)  # (TM, N) on the MXU, f32 accumulate

    sq_i = sqr_ref[...]                     # (TM, 1) f32  (precomputed in wrapper)
    sq_j = sql_ref[...]                     # (1,  N) f32  (lane-oriented, no .T)
    dist = jnp.sqrt(jnp.maximum(sq_i + sq_j - 2.0 * gram, 1e-12))   # (TM, N)

    is_pos = tr_ref[...] == tl_ref[...]     # (TM, N) bool, pure broadcast compare
    is_pos_f = is_pos.astype(jnp.float32)

    dist_ap = dist * is_pos_f               # masked positive distances
    dist_an = dist - dist_ap                # == dist * is_neg (no second mask mul)

    a_ap = alpha * dist_ap
    a_an = alpha * dist_an
    max_ap = jnp.max(a_ap, axis=1, keepdims=True)     # matches torch max(d*mask)
    max_an = jnp.max(-a_an, axis=1, keepdims=True)

    # One fused exp for both softmaxes (halves EUP transcendental count).
    arg = jnp.where(is_pos, a_ap - max_ap, -a_an - max_an)
    e = jnp.exp(arg)
    e_ap = e * is_pos_f
    e_an = e - e_ap

    z_ap = jnp.sum(e_ap, axis=1, keepdims=True) + 1e-6
    z_an = jnp.sum(e_an, axis=1, keepdims=True) + 1e-6
    furthest_positive = jnp.sum(dist_ap * e_ap, axis=1, keepdims=True) / z_ap
    closest_negative = jnp.sum(dist_an * e_an, axis=1, keepdims=True) / z_an

    margin = gamma * (closest_negative - furthest_positive)           # (TM, 1)
    # Stable SoftMarginLoss (y=1):  log(1 + exp(-m)) = max(-m, 0) + log(1 + exp(-|m|))
    loss_row = jnp.maximum(-margin, 0.0) + jnp.log(1.0 + jnp.exp(-jnp.abs(margin)))
    correct_row = (closest_negative >= furthest_positive).astype(jnp.float32)

    tm, lanes = out_ref.shape
    lane = jax.lax.broadcasted_iota(jnp.int32, (tm, lanes), 1)
    out_ref[...] = jnp.where(lane == 0, loss_row,
                             jnp.where(lane == 1, correct_row, 0.0))


def _pick_tm(n, cap):
    """Largest row-tile that divides n, is a multiple of 8 and <= cap."""
    if n <= cap:
        return n
    for tm in range(cap, 7, -8):
        if n % tm == 0:
            return tm
    return n  # fall back to a single block


def triplet_loss_adp(inputs, label_assign, targets, true_targets, prob,
                     threshold=0.6, alpha_unused=100, normalize_feature=False,
                     *, self_alpha=1.0, self_gamma=1.0, matmul_dtype=None,
                     block_rows=256):
    """Mirrors TripletLoss_ADP(alpha=1, gamma=1, square=0).forward (square==0 path).

    label_assign / true_targets / prob / threshold / alpha_unused are unused by the
    PyTorch forward on this code path; kept for signature parity.
    """
    x = inputs.astype(jnp.float32)
    if normalize_feature:
        x = x / (jnp.linalg.norm(x, axis=-1, keepdims=True) + 1e-12)

    N, D = x.shape
    if matmul_dtype is None:
        matmul_dtype = jnp.bfloat16 if inputs.dtype == jnp.bfloat16 else jnp.float32

    # Precompute lane/sublane-oriented norms and labels once (no in-kernel transposes).
    sq = jnp.sum(x * x, axis=1)                          # (N,) f32
    sq_col = sq.reshape(N, 1)
    sq_lane = sq.reshape(1, N)
    t = targets.astype(jnp.int32)
    t_col = t.reshape(N, 1)
    t_lane = t.reshape(1, N)

    x_mm = x.astype(matmul_dtype)

    TM = _pick_tm(N, block_rows)
    grid = (N // TM,)

    kernel = functools.partial(_triplet_adp_kernel,
                               alpha=float(self_alpha), gamma=float(self_gamma))

    out = pl.pallas_call(
        kernel,
        out_shape=jax.ShapeDtypeStruct((N, 128), jnp.float32),
        grid=grid,
        in_specs=[
            pl.BlockSpec((TM, D), lambda i: (i, 0)),     # streamed row tile
            pl.BlockSpec((N, D), lambda i: (0, 0)),      # full x resident (cols operand)
            pl.BlockSpec((TM, 1), lambda i: (i, 0)),     # row-tile squared norms
            pl.BlockSpec((1, N), lambda i: (0, 0)),      # lane-oriented squared norms
            pl.BlockSpec((TM, 1), lambda i: (i, 0)),     # row-tile labels
            pl.BlockSpec((1, N), lambda i: (0, 0)),      # lane-oriented labels
        ],
        out_specs=pl.BlockSpec((TM, 128), lambda i: (i, 0)),
        compiler_params=pltpu.CompilerParams(
            dimension_semantics=("parallel",),           # megacore on v7x, no-op v5e/v6e
            vmem_limit_bytes=48 * 1024 * 1024),          # stays under v7x's 64 MiB VMEM
    )(x_mm, x_mm, sq_col, sq_lane, t_col, t_lane)

    loss = jnp.mean(out[:, 0])
    correct = jnp.sum(out[:, 1]).astype(jnp.int32)
    return loss, correct, N
    # TODO(synk): for very large N an online-softmax (flash-style) column-streaming
    # variant would keep VMEM independent of N; not needed at these sizes.


def _reference(inputs, targets, alpha=1.0, gamma=1.0):
    """Pure-JAX reference of the PyTorch forward (square==0)."""
    x = inputs.astype(jnp.float32)
    sq = jnp.sum(x * x, axis=1, keepdims=True)
    gram = jax.lax.dot_general(x, x, dimension_numbers=(((1,), (1,)), ((), ())),
                               precision=jax.lax.Precision.HIGHEST,
                               preferred_element_type=jnp.float32)
    dist = jnp.sqrt(jnp.maximum(sq + sq.T - 2.0 * gram, 1e-12))
    t = targets.reshape(-1, 1)
    is_pos = (t == t.T).astype(jnp.float32)
    is_neg = 1.0 - is_pos
    dist_ap = dist * is_pos
    dist_an = dist * is_neg

    def sw(d, mask):
        mv = jnp.max(d * mask, axis=1, keepdims=True)
        e = jnp.exp(d - mv) * mask
        return e / (jnp.sum(e, axis=1, keepdims=True) + 1e-6)

    w_ap = sw(dist_ap * alpha, is_pos)
    w_an = sw(-dist_an * alpha, is_neg)
    fp = jnp.sum(dist_ap * w_ap, axis=1)
    cn = jnp.sum(dist_an * w_an, axis=1)
    m = gamma * (cn - fp)
    loss = jnp.mean(jnp.maximum(-m, 0.0) + jnp.log1p(jnp.exp(-jnp.abs(m))))
    correct = jnp.sum(cn >= fp)
    return loss, correct


if __name__ == "__main__":
    key = jax.random.PRNGKey(0)
    k_x, k_t, k_p = jax.random.split(key, 3)

    N, D = 64, 128                      # small, (8,128)-aligned embedding batch
    inputs = jax.random.normal(k_x, (N, D), dtype=jnp.float32)
    targets = jax.random.randint(k_t, (N,), 0, 4, dtype=jnp.int32)
    # unused-by-forward extras (signature parity only)
    label_assign = targets
    true_targets = targets
    prob = jax.random.uniform(k_p, (N,), dtype=jnp.float32)

    # f32 MXU path (exercises a 2-step row-block grid: TM=32)
    loss, correct, n = triplet_loss_adp(inputs, label_assign, targets,
                                        true_targets, prob, block_rows=32)
    loss = jax.block_until_ready(loss)
    correct = jax.block_until_ready(correct)

    ref_loss, ref_correct = _reference(inputs, targets)
    assert jnp.allclose(loss, ref_loss, atol=1e-3, rtol=1e-3), (loss, ref_loss)
    assert int(correct) == int(ref_correct), (correct, ref_correct)
    assert n == N

    # bf16 MXU path (native MXU throughput); distances lose precision through
    # sq + sq.T - 2*gram, so only a sanity check here.
    loss_bf, correct_bf, _ = triplet_loss_adp(inputs, label_assign, targets,
                                              true_targets, prob, block_rows=32,
                                              matmul_dtype=jnp.bfloat16)
    loss_bf = jax.block_until_ready(loss_bf)
    assert bool(jnp.isfinite(loss_bf)), loss_bf

    print("KERNEL_OK")
</pallas_src>

<mosaic_0001>
module attributes {stable_mosaic.version = 11 : i64} {
  func.func @_triplet_adp_kernel(%arg0: i32, %arg1: memref<32x128xf32, #tpu.memory_space<vmem>>, %arg2: memref<64x128xf32, #tpu.memory_space<vmem>>, %arg3: memref<32x1xf32, #tpu.memory_space<vmem>>, %arg4: memref<1x64xf32, #tpu.memory_space<vmem>>, %arg5: memref<32x1xi32, #tpu.memory_space<vmem>>, %arg6: memref<1x64xi32, #tpu.memory_space<vmem>>, %arg7: memref<32x128xf32, #tpu.memory_space<vmem>>) attributes {dimension_semantics = [#tpu.dimension_semantics<parallel>], iteration_bounds = array<i64: 2>, scalar_prefetch = 0 : i64, scratch_operands = 0 : i64, tpu.core_type = #tpu.core_type<tc>, window_params = [{transform_indices = @transform_0, window_bounds = array<i64: 32, 128>}, {pipeline_mode = #tpu.pipeline_mode<synchronous>, transform_indices = @transform_1, window_bounds = array<i64: 64, 128>}, {transform_indices = @transform_2, window_bounds = array<i64: 32, 1>}, {pipeline_mode = #tpu.pipeline_mode<synchronous>, transform_indices = @transform_3, window_bounds = array<i64: 1, 64>}, {transform_indices = @transform_4, window_bounds = array<i64: 32, 1>}, {pipeline_mode = #tpu.pipeline_mode<synchronous>, transform_indices = @transform_5, window_bounds = array<i64: 1, 64>}, {transform_indices = @transform_6, window_bounds = array<i64: 32, 128>}]} {
    %c0 = arith.constant 0 : index
    %c0_0 = arith.constant 0 : index
    %0 = vector.load %arg1[%c0, %c0_0] : memref<32x128xf32, #tpu.memory_space<vmem>>, vector<32x128xf32>
    %c0_1 = arith.constant 0 : index
    %c0_2 = arith.constant 0 : index
    %1 = vector.load %arg2[%c0_1, %c0_2] : memref<64x128xf32, #tpu.memory_space<vmem>>, vector<64x128xf32>
    %cst = arith.constant dense<0.000000e+00> : vector<32x64xf32>
    %2 = tpu.matmul %0, %1, %cst {dimension_numbers = #tpu.dot_dimension_numbers<[1], [1], [0], [0], [0, 0, 1, 0], [], []>, precision = #tpu.contract_precision<fp32>} : vector<32x128xf32>, vector<64x128xf32>, vector<32x64xf32> -> vector<32x64xf32>
    %c0_3 = arith.constant 0 : index
    %c0_4 = arith.constant 0 : index
    %3 = vector.load %arg3[%c0_3, %c0_4] : memref<32x1xf32, #tpu.memory_space<vmem>>, vector<32x1xf32>
    %c0_5 = arith.constant 0 : index
    %c0_6 = arith.constant 0 : index
    %4 = vector.load %arg4[%c0_5, %c0_6] : memref<1x64xf32, #tpu.memory_space<vmem>>, vector<1x64xf32>
    %5 = vector.broadcast %3 : vector<32x1xf32> to vector<32x64xf32>
    %6 = vector.broadcast %4 : vector<1x64xf32> to vector<32x64xf32>
    %7 = arith.addf %5, %6 : vector<32x64xf32>
    %cst_7 = arith.constant 2.000000e+00 : f32
    %8 = vector.broadcast %cst_7 : f32 to vector<32x64xf32>
    %9 = arith.mulf %8, %2 : vector<32x64xf32>
    %10 = arith.subf %7, %9 : vector<32x64xf32>
    %cst_8 = arith.constant 9.99999996E-13 : f32
    %11 = vector.broadcast %cst_8 : f32 to vector<32x64xf32>
    %12 = arith.maximumf %10, %11 : vector<32x64xf32>
    %13 = math.sqrt %12 : vector<32x64xf32>
    %c0_9 = arith.constant 0 : index
    %c0_10 = arith.constant 0 : index
    %14 = vector.load %arg5[%c0_9, %c0_10] : memref<32x1xi32, #tpu.memory_space<vmem>>, vector<32x1xi32>
    %c0_11 = arith.constant 0 : index
    %c0_12 = arith.constant 0 : index
    %15 = vector.load %arg6[%c0_11, %c0_12] : memref<1x64xi32, #tpu.memory_space<vmem>>, vector<1x64xi32>
    %16 = vector.broadcast %14 : vector<32x1xi32> to vector<32x64xi32>
    %17 = vector.broadcast %15 : vector<1x64xi32> to vector<32x64xi32>
    %18 = arith.cmpi eq, %16, %17 : vector<32x64xi32>
    %19 = arith.extui %18 : vector<32x64xi1> to vector<32x64xi32>
    %20 = arith.sitofp %19 : vector<32x64xi32> to vector<32x64xf32>
    %21 = arith.mulf %13, %20 : vector<32x64xf32>
    %22 = arith.subf %13, %21 : vector<32x64xf32>
    %cst_13 = arith.constant 1.000000e+00 : f32
    %23 = vector.broadcast %cst_13 : f32 to vector<32x64xf32>
    %24 = arith.mulf %23, %21 : vector<32x64xf32>
    %cst_14 = arith.constant 1.000000e+00 : f32
    %25 = vector.broadcast %cst_14 : f32 to vector<32x64xf32>
    %26 = arith.mulf %25, %22 : vector<32x64xf32>
    %cst_15 = arith.constant dense<0xFF800000> : vector<32xf32>
    %27 = vector.multi_reduction <maximumf>, %24, %cst_15 [1] : vector<32x64xf32> to vector<32xf32>
    %28 = vector.shape_cast %27 : vector<32xf32> to vector<32x1xf32>
    %cst_16 = arith.constant 0.000000e+00 : f32
    %29 = vector.broadcast %cst_16 : f32 to vector<32x64xf32>
    %30 = arith.subf %29, %26 : vector<32x64xf32>
    %cst_17 = arith.constant dense<0xFF800000> : vector<32xf32>
    %31 = vector.multi_reduction <maximumf>, %30, %cst_17 [1] : vector<32x64xf32> to vector<32xf32>
    %32 = vector.shape_cast %31 : vector<32xf32> to vector<32x1xf32>
    %33 = vector.broadcast %28 : vector<32x1xf32> to vector<32x64xf32>
    %34 = arith.subf %24, %33 : vector<32x64xf32>
    %cst_18 = arith.constant 0.000000e+00 : f32
    %35 = vector.broadcast %cst_18 : f32 to vector<32x64xf32>
    %36 = arith.subf %35, %26 : vector<32x64xf32>
    %37 = vector.broadcast %32 : vector<32x1xf32> to vector<32x64xf32>
    %38 = arith.subf %36, %37 : vector<32x64xf32>
    %39 = arith.select %18, %34, %38 : vector<32x64xi1>, vector<32x64xf32>
    %40 = math.exp %39 : vector<32x64xf32>
    %41 = arith.mulf %40, %20 : vector<32x64xf32>
    %42 = arith.subf %40, %41 : vector<32x64xf32>
    %cst_19 = arith.constant dense<0.000000e+00> : vector<32xf32>
    %43 = vector.multi_reduction <add>, %41, %cst_19 [1] : vector<32x64xf32> to vector<32xf32>
    %44 = vector.shape_cast %43 : vector<32xf32> to vector<32x1xf32>
    %cst_20 = arith.constant 9.99999997E-7 : f32
    %45 = vector.broadcast %cst_20 : f32 to vector<32x1xf32>
    %46 = arith.addf %44, %45 : vector<32x1xf32>
    %cst_21 = arith.constant dense<0.000000e+00> : vector<32xf32>
    %47 = vector.multi_reduction <add>, %42, %cst_21 [1] : vector<32x64xf32> to vector<32xf32>
    %48 = vector.shape_cast %47 : vector<32xf32> to vector<32x1xf32>
    %cst_22 = arith.constant 9.99999997E-7 : f32
    %49 = vector.broadcast %cst_22 : f32 to vector<32x1xf32>
    %50 = arith.addf %48, %49 : vector<32x1xf32>
    %51 = arith.mulf %21, %41 : vector<32x64xf32>
    %cst_23 = arith.constant dense<0.000000e+00> : vector<32xf32>
    %52 = vector.multi_reduction <add>, %51, %cst_23 [1] : vector<32x64xf32> to vector<32xf32>
    %53 = vector.shape_cast %52 : vector<32xf32> to vector<32x1xf32>
    %54 = arith.divf %53, %46 : vector<32x1xf32>
    %55 = arith.mulf %22, %42 : vector<32x64xf32>
    %cst_24 = arith.constant dense<0.000000e+00> : vector<32xf32>
    %56 = vector.multi_reduction <add>, %55, %cst_24 [1] : vector<32x64xf32> to vector<32xf32>
    %57 = vector.shape_cast %56 : vector<32xf32> to vector<32x1xf32>
    %58 = arith.divf %57, %50 : vector<32x1xf32>
    %59 = arith.subf %58, %54 : vector<32x1xf32>
    %cst_25 = arith.constant 1.000000e+00 : f32
    %60 = vector.broadcast %cst_25 : f32 to vector<32x1xf32>
    %61 = arith.mulf %60, %59 : vector<32x1xf32>
    %cst_26 = arith.constant 0.000000e+00 : f32
    %62 = vector.broadcast %cst_26 : f32 to vector<32x1xf32>
    %63 = arith.subf %62, %61 : vector<32x1xf32>
    %cst_27 = arith.constant 0.000000e+00 : f32
    %64 = vector.broadcast %cst_27 : f32 to vector<32x1xf32>
    %65 = arith.maximumf %63, %64 : vector<32x1xf32>
    %66 = math.absf %61 : vector<32x1xf32>
    %cst_28 = arith.constant 0.000000e+00 : f32
    %67 = vector.broadcast %cst_28 : f32 to vector<32x1xf32>
    %68 = arith.subf %67, %66 : vector<32x1xf32>
    %69 = math.exp %68 : vector<32x1xf32>
    %cst_29 = arith.constant 1.000000e+00 : f32
    %70 = vector.broadcast %cst_29 : f32 to vector<32x1xf32>
    %71 = arith.addf %70, %69 : vector<32x1xf32>
    %72 = math.log %71 : vector<32x1xf32>
    %73 = arith.addf %65, %72 : vector<32x1xf32>
    %74 = arith.cmpf oge, %58, %54 : vector<32x1xf32>
    %75 = arith.extui %74 : vector<32x1xi1> to vector<32x1xi32>
    %76 = arith.sitofp %75 : vector<32x1xi32> to vector<32x1xf32>
    %77 = tpu.iota {dimensions = array<i32: 1>} : vector<32x128xi32>
    %c0_i32 = arith.constant 0 : i32
    %78 = vector.broadcast %c0_i32 : i32 to vector<32x128xi32>
    %79 = arith.cmpi eq, %77, %78 : vector<32x128xi32>
    %c1_i32 = arith.constant 1 : i32
    %80 = vector.broadcast %c1_i32 : i32 to vector<32x128xi32>
    %81 = arith.cmpi eq, %77, %80 : vector<32x128xi32>
    %cst_30 = arith.constant 0.000000e+00 : f32
    %82 = vector.shape_cast %76 : vector<32x1xf32> to vector<32x1xf32>
    %83 = vector.broadcast %82 : vector<32x1xf32> to vector<32x128xf32>
    %84 = vector.broadcast %cst_30 : f32 to vector<32x128xf32>
    %85 = arith.select %81, %83, %84 : vector<32x128xi1>, vector<32x128xf32>
    %86 = vector.shape_cast %73 : vector<32x1xf32> to vector<32x1xf32>
    %87 = vector.broadcast %86 : vector<32x1xf32> to vector<32x128xf32>
    %88 = arith.select %79, %87, %85 : vector<32x128xi1>, vector<32x128xf32>
    %c0_31 = arith.constant 0 : index
    %c0_32 = arith.constant 0 : index
    %89 = vector.load %arg7[%c0_31, %c0_32] : memref<32x128xf32, #tpu.memory_space<vmem>>, vector<32x128xf32>
    tpu.vector_store %arg7[%c0_31, %c0_32], %88 {strides = array<i32>} : memref<32x128xf32, #tpu.memory_space<vmem>>, vector<32x128xf32>,
    return
  }
  func.func @transform_0(%arg0: i32) -> (i32, i32) {
    %c0_i32 = arith.constant 0 : i32
    %c0_i32_0 = arith.constant 0 : i32
    return %arg0, %c0_i32 : i32, i32
  }
  func.func @transform_1(%arg0: i32) -> (i32, i32) {
    %c0_i32 = arith.constant 0 : i32
    %c0_i32_0 = arith.constant 0 : i32
    %c0_i32_1 = arith.constant 0 : i32
    return %c0_i32, %c0_i32_0 : i32, i32
  }
  func.func @transform_2(%arg0: i32) -> (i32, i32) {
    %c0_i32 = arith.constant 0 : i32
    %c0_i32_0 = arith.constant 0 : i32
    return %arg0, %c0_i32 : i32, i32
  }
  func.func @transform_3(%arg0: i32) -> (i32, i32) {
    %c0_i32 = arith.constant 0 : i32
    %c0_i32_0 = arith.constant 0 : i32
    %c0_i32_1 = arith.constant 0 : i32
    return %c0_i32, %c0_i32_0 : i32, i32
  }
  func.func @transform_4(%arg0: i32) -> (i32, i32) {
    %c0_i32 = arith.constant 0 : i32
    %c0_i32_0 = arith.constant 0 : i32
    return %arg0, %c0_i32 : i32, i32
  }
  func.func @transform_5(%arg0: i32) -> (i32, i32) {
    %c0_i32 = arith.constant 0 : i32
    %c0_i32_0 = arith.constant 0 : i32
    %c0_i32_1 = arith.constant 0 : i32
    return %c0_i32, %c0_i32_0 : i32, i32
  }
  func.func @transform_6(%arg0: i32) -> (i32, i32) {
    %c0_i32 = arith.constant 0 : i32
    %c0_i32_0 = arith.constant 0 : i32
    return %arg0, %c0_i32 : i32, i32
  }
}

</mosaic_0001>

<llo_original>
// kernel: tpu_custom_call.1
$region0: #{tpu_custom_call.1}
  #allocation0 [shape = 'u32[]', space=smem, size = 0x4, offset = 0x4, fixed_abs, tag = 'smem constant byte address 0x4 - core index']
  #allocation1 [shape = 'u32[144,128]{1,0:T(1,128)}', space=vmem, size = 0x12000, scoped, tag = 'internal scratch']
  %s0 = inlined_call_operand.vmem [shape: f32[64,128], index: 0, kind: input, shape index: {}]
  %s1 = inlined_call_operand.vmem [shape: f32[64,128], index: 1, kind: input, shape index: {}]
  %s2 = inlined_call_operand.vmem [shape: f32[64,1], index: 2, kind: input, shape index: {}]
  %s3 = inlined_call_operand.vmem [shape: f32[1,64], index: 3, kind: input, shape index: {}]
  %s4 = inlined_call_operand.vmem [shape: s32[64,1], index: 4, kind: input, shape index: {}]
  %s5 = inlined_call_operand.vmem [shape: s32[1,64], index: 5, kind: input, shape index: {}]
  %s6 = inlined_call_operand.hbm [shape: f32[64,128], index: 6, kind: output, shape index: {}]
  %s7 = sld [smem:[#allocation0]]
  $region57: #{tpu_custom_call.1} parent=0
    _
  %s9 = ssub.s32 1, %s7
  %s10 = scalar_select 0, %s9, %s7
  $region1: #{tpu_custom_call.1} parent=0
    #allocation2 [shape = 'u8[32768]{0}', space=vmem, size = 0x8000, scoped, tag = 'output window, operand 0']
    #allocation3 [shape = 's32[2]{0}', space=sflag, size = 0x8, scoped, tag = 'scoped memory for tpu_custom_call.1']
    %11 = vsyncpa [#allocation3], 0
    %s12 = scalar_lea.sflag [#allocation3], 1
    %13 = vsyncpa %s12, 0
    loop: start=0, step=1, limit=4
    $region2: #{tpu_custom_call.1} parent=1 // loop_pre_header
      _
    $region3: #{tpu_custom_call.1} parent=1 // loop_header
      %s15 = sphi 0, %s19
      %p16 = scmp.ge.s32.totalorder %s15, 4
      %s25 = sphi 0, %s27
      %s28 = sphi 0, %s25
      %s29 = sphi 0, %s28
      %s45 = sphi 0, %s29
      %s49 = sphi 0, %s49
      %s51 = sphi 0, %s49
      %s52 = sphi 0, %s51
      %s66 = sphi 0, %s52
      %s72 = sphi 0, %s74
      %s75 = sphi 0, %s72
      %s76 = sphi 0, %s75
      %s92 = sphi 0, %s76
      %s96 = sphi 0, %s96
      %s98 = sphi 0, %s96
      %s99 = sphi 0, %s98
      %s113 = sphi 0, %s99
      %s119 = sphi 0, %s121
      %s122 = sphi 0, %s119
      %s123 = sphi 0, %s122
      %s139 = sphi 0, %s123
      %s143 = sphi 0, %s143
      %s145 = sphi 0, %s143
      %s146 = sphi 0, %s145
      %s160 = sphi 0, %s146
      %s166 = sphi 0, %s168
      %s169 = sphi 0, %s166
      %s170 = sphi 0, %s169
      %s186 = sphi 0, %s170
    $region4: #{tpu_custom_call.1} parent=1 // loop_header_branch
      %18 = sbr.rel (%p16) target = $region8
    $region5: #{tpu_custom_call.1} parent=1 // loop_body
      %s20 = ssub.s32 %s15, 1
      %s21 = ssub.s32 %s15, 2
      %s22 = sadd.s32 %s15, 1
      %s23 = ssub.s32 %s15, %s22
      %p24 = scmp.eq.s32.totalorder %s23, 0
      %s26 = sadd.s32 %s25, 1
      %s27 = scalar_select %p24, %s25, %s26
      %p30 = pneg %p24
      %p31 = scmp.eq.s32.totalorder %s15, 1
      %p32 = por %p30, %p31
      %p33 = scmp.ne.s32.totalorder %s25, %s28
      %p34 = scmp.eq.s32.totalorder %s15, 0
      %p35 = por %p33, %p34
      %p36 = scmp.ne.s32.totalorder %s25, %s28
      %p37 = scmp.eq.s32.totalorder %s20, 1
      %p38 = por %p36, %p37
      %p39 = scmp.ne.s32.totalorder %s28, %s29
      %p40 = scmp.eq.s32.totalorder %s20, 0
      %p41 = por %p39, %p40
      %p42 = scmp.ne.s32.totalorder %s28, %s29
      %p43 = scmp.eq.s32.totalorder %s21, 1
      %p44 = por %p42, %p43
      %p46 = scmp.ne.s32.totalorder %s29, %s45
      %p47 = scmp.eq.s32.totalorder %s21, 0
      %p48 = por %p46, %p47
      %s50 = sadd.s32 %s49, 1
      %p53 = scmp.eq.s32.totalorder %s15, 1
      %p54 = scmp.ne.s32.totalorder %s49, %s51
      %p55 = scmp.eq.s32.totalorder %s15, 0
      %p56 = por %p54, %p55
      %p57 = scmp.ne.s32.totalorder %s49, %s51
      %p58 = scmp.eq.s32.totalorder %s20, 1
      %p59 = por %p57, %p58
      %p60 = scmp.ne.s32.totalorder %s51, %s52
      %p61 = scmp.eq.s32.totalorder %s20, 0
      %p62 = por %p60, %p61
      %p63 = scmp.ne.s32.totalorder %s51, %s52
      %p64 = scmp.eq.s32.totalorder %s21, 1
      %p65 = por %p63, %p64
      %p67 = scmp.ne.s32.totalorder %s52, %s66
      %p68 = scmp.eq.s32.totalorder %s21, 0
      %p69 = por %p67, %p68
      %s70 = ssub.s32 %s15, %s22
      %p71 = scmp.eq.s32.totalorder %s70, 0
      %s73 = sadd.s32 %s72, 1
      %s74 = scalar_select %p71, %s72, %s73
      %p77 = pneg %p71
      %p78 = scmp.eq.s32.totalorder %s15, 1
      %p79 = por %p77, %p78
      %p80 = scmp.ne.s32.totalorder %s72, %s75
      %p81 = scmp.eq.s32.totalorder %s15, 0
      %p82 = por %p80, %p81
      %p83 = scmp.ne.s32.totalorder %s72, %s75
      %p84 = scmp.eq.s32.totalorder %s20, 1
      %p85 = por %p83, %p84
      %p86 = scmp.ne.s32.totalorder %s75, %s76
      %p87 = scmp.eq.s32.totalorder %s20, 0
      %p88 = por %p86, %p87
      %p89 = scmp.ne.s32.totalorder %s75, %s76
      %p90 = scmp.eq.s32.totalorder %s21, 1
      %p91 = por %p89, %p90
      %p93 = scmp.ne.s32.totalorder %s76, %s92
      %p94 = scmp.eq.s32.totalorder %s21, 0
      %p95 = por %p93, %p94
      %s97 = sadd.s32 %s96, 1
      %p100 = scmp.eq.s32.totalorder %s15, 1
      %p101 = scmp.ne.s32.totalorder %s96, %s98
      %p102 = scmp.eq.s32.totalorder %s15, 0
      %p103 = por %p101, %p102
      %p104 = scmp.ne.s32.totalorder %s96, %s98
      %p105 = scmp.eq.s32.totalorder %s20, 1
      %p106 = por %p104, %p105
      %p107 = scmp.ne.s32.totalorder %s98, %s99
      %p108 = scmp.eq.s32.totalorder %s20, 0
      %p109 = por %p107, %p108
      %p110 = scmp.ne.s32.totalorder %s98, %s99
      %p111 = scmp.eq.s32.totalorder %s21, 1
      %p112 = por %p110, %p111
      %p114 = scmp.ne.s32.totalorder %s99, %s113
      %p115 = scmp.eq.s32.totalorder %s21, 0
      %p116 = por %p114, %p115
      %s117 = ssub.s32 %s15, %s22
      %p118 = scmp.eq.s32.totalorder %s117, 0
      %s120 = sadd.s32 %s119, 1
      %s121 = scalar_select %p118, %s119, %s120
      %p124 = pneg %p118
      %p125 = scmp.eq.s32.totalorder %s15, 1
      %p126 = por %p124, %p125
      %p127 = scmp.ne.s32.totalorder %s119, %s122
      %p128 = scmp.eq.s32.totalorder %s15, 0
      %p129 = por %p127, %p128
      %p130 = scmp.ne.s32.totalorder %s119, %s122
      %p131 = scmp.eq.s32.totalorder %s20, 1
      %p132 = por %p130, %p131
      %p133 = scmp.ne.s32.totalorder %s122, %s123
      %p134 = scmp.eq.s32.totalorder %s20, 0
      %p135 = por %p133, %p134
      %p136 = scmp.ne.s32.totalorder %s122, %s123
      %p137 = scmp.eq.s32.totalorder %s21, 1
      %p138 = por %p136, %p137
      %p140 = scmp.ne.s32.totalorder %s123, %s139
      %p141 = scmp.eq.s32.totalorder %s21, 0
      %p142 = por %p140, %p141
      %s144 = sadd.s32 %s143, 1
      %p147 = scmp.eq.s32.totalorder %s15, 1
      %p148 = scmp.ne.s32.totalorder %s143, %s145
      %p149 = scmp.eq.s32.totalorder %s15, 0
      %p150 = por %p148, %p149
      %p151 = scmp.ne.s32.totalorder %s143, %s145
      %p152 = scmp.eq.s32.totalorder %s20, 1
      %p153 = por %p151, %p152
      %p154 = scmp.ne.s32.totalorder %s145, %s146
      %p155 = scmp.eq.s32.totalorder %s20, 0
      %p156 = por %p154, %p155
      %p157 = scmp.ne.s32.totalorder %s145, %s146
      %p158 = scmp.eq.s32.totalorder %s21, 1
      %p159 = por %p157, %p158
      %p161 = scmp.ne.s32.totalorder %s146, %s160
      %p162 = scmp.eq.s32.totalorder %s21, 0
      %p163 = por %p161, %p162
      %s164 = ssub.s32 %s15, %s22
      %p165 = scmp.eq.s32.totalorder %s164, 0
      %s167 = sadd.s32 %s166, 1
      %s168 = scalar_select %p165, %s166, %s167
      %p171 = pneg %p165
      %p172 = scmp.eq.s32.totalorder %s15, 1
      %p173 = por %p171, %p172
      %p174 = scmp.ne.s32.totalorder %s166, %s169
      %p175 = scmp.eq.s32.totalorder %s15, 0
      %p176 = por %p174, %p175
      %p177 = scmp.ne.s32.totalorder %s166, %s169
      %p178 = scmp.eq.s32.totalorder %s20, 1
      %p179 = por %p177, %p178
      %p180 = scmp.ne.s32.totalorder %s169, %s170
      %p181 = scmp.eq.s32.totalorder %s20, 0
      %p182 = por %p180, %p181
      %p183 = scmp.ne.s32.totalorder %s169, %s170
      %p184 = scmp.eq.s32.totalorder %s21, 1
      %p185 = por %p183, %p184
      %p187 = scmp.ne.s32.totalorder %s170, %s186
      %p188 = scmp.eq.s32.totalorder %s21, 0
      %p189 = por %p187, %p188
      %p190 = scmp.le.s32.totalorder 1, %s15
      %p191 = scmp.lt.s32.totalorder %s15, 3
      %p192 = pnand %p190, %p191
      %p193 = pneg %p192
      // Predicated region
      $region9: #{tpu_custom_call.1} parent=5 // pred_check
        _
      $region10: #{tpu_custom_call.1} parent=5 // pred_check_branch
        %195 = sbr.rel (%p192) target = $region12
      $region11: #{tpu_custom_call.1} parent=5 // pred_region
        %s196 = ssub.s32 %s15, 1
        // Predicated region
        $region13: #{tpu_custom_call.1} parent=11 // pred_check
          %p197 = pneg %p62
        $region14: #{tpu_custom_call.1} parent=11 // pred_check_branch
          %199 = sbr.rel (%p197) target = $region16
        $region15: #{tpu_custom_call.1} parent=11 // pred_region
          _
        $region16: #{tpu_custom_call.1} parent=11 // pred_fallthru
          _
        // Predicated region
        $region17: #{tpu_custom_call.1} parent=11 // pred_check
          %p200 = pneg %p109
        $region18: #{tpu_custom_call.1} parent=11 // pred_check_branch
          %202 = sbr.rel (%p200) target = $region20
        $region19: #{tpu_custom_call.1} parent=11 // pred_region
          _
        $region20: #{tpu_custom_call.1} parent=11 // pred_fallthru
          _
        // Predicated region
        $region21: #{tpu_custom_call.1} parent=11 // pred_check
          %p203 = pneg %p156
        $region22: #{tpu_custom_call.1} parent=11 // pred_check_branch
          %205 = sbr.rel (%p203) target = $region24
        $region23: #{tpu_custom_call.1} parent=11 // pred_region
          _
        $region24: #{tpu_custom_call.1} parent=11 // pred_fallthru
          _
      $region12: #{tpu_custom_call.1} parent=5 // pred_fallthru
        _
      %p206 = scmp.lt.s32.totalorder %s15, 2
      // Predicated region
      $region25: #{tpu_custom_call.1} parent=5 // pred_check
        %p207 = pneg %p206
      $region26: #{tpu_custom_call.1} parent=5 // pred_check_branch
        %209 = sbr.rel (%p207) target = $region28
      $region27: #{tpu_custom_call.1} parent=5 // pred_region
        // Predicated region
        $region29: #{tpu_custom_call.1} parent=27 // pred_check
          %p210 = pneg %p35
        $region30: #{tpu_custom_call.1} parent=27 // pred_check_branch
          %212 = sbr.rel (%p210) target = $region32
        $region31: #{tpu_custom_call.1} parent=27 // pred_region
          %s213 = smul.u32 4, %s15
          %p214 = scmp.lt.s32.totalorder %s213, 7
          %s215 = scalar_select %p214, %s213, 7
          %s216 = smul.addr %s215, 8
          %s217 = scalar_lea.vmem %s0, %s216
          %s218 = smul.u32 4, %s15
        $region32: #{tpu_custom_call.1} parent=27 // pred_fallthru
          _
        // Predicated region
        $region33: #{tpu_custom_call.1} parent=27 // pred_check
          %p219 = pneg %p82
        $region34: #{tpu_custom_call.1} parent=27 // pred_check_branch
          %221 = sbr.rel (%p219) target = $region36
        $region35: #{tpu_custom_call.1} parent=27 // pred_region
          %s222 = smul.u32 4, %s15
          %p223 = scmp.lt.s32.totalorder %s222, 7
          %s224 = scalar_select %p223, %s222, 7
          %s225 = smul.addr %s224, 8
          %s226 = scalar_lea.vmem %s2, %s225
          %s227 = smul.u32 4, %s15
        $region36: #{tpu_custom_call.1} parent=27 // pred_fallthru
          _
        // Predicated region
        $region37: #{tpu_custom_call.1} parent=27 // pred_check
          %p228 = pneg %p129
        $region38: #{tpu_custom_call.1} parent=27 // pred_check_branch
          %230 = sbr.rel (%p228) target = $region40
        $region39: #{tpu_custom_call.1} parent=27 // pred_region
          %s231 = smul.u32 4, %s15
          %p232 = scmp.lt.s32.totalorder %s231, 7
          %s233 = scalar_select %p232, %s231, 7
          %s234 = smul.addr %s233, 8
          %s235 = scalar_lea.vmem %s4, %s234
          %s236 = smul.u32 4, %s15
        $region40: #{tpu_custom_call.1} parent=27 // pred_fallthru
          _
      $region28: #{tpu_custom_call.1} parent=5 // pred_fallthru
        _
      %p237 = scmp.le.s32.totalorder 1, %s15
      %p238 = scmp.lt.s32.totalorder %s15, 3
      %p239 = pnand %p237, %p238
      %p240 = pneg %p239
      // Predicated region
      $region41: #{tpu_custom_call.1} parent=5 // pred_check
        _
      $region42: #{tpu_custom_call.1} parent=5 // pred_check_branch
        %242 = sbr.rel (%p239) target = $region44
      $region43: #{tpu_custom_call.1} parent=5 // pred_region
        %s243 = ssub.s32 %s15, 1
        %s244 = smul.u32 4, %s20
        %p245 = scmp.lt.s32.totalorder %s244, 7
        %s246 = scalar_select %p245, %s244, 7
        %s247 = smul.addr %s246, 8
        %s248 = scalar_lea.vmem %s0, %s247
        %p249 = pneg %p41
        %p250 = pneg %p38
        %p251 = pneg %p62
        %p252 = pneg %p59
        %s253 = smul.u32 4, %s20
        %p254 = scmp.lt.s32.totalorder %s253, 7
        %s255 = scalar_select %p254, %s253, 7
        %s256 = smul.addr %s255, 8
        %s257 = scalar_lea.vmem %s2, %s256
        %p258 = pneg %p88
        %p259 = pneg %p85
        %p260 = pneg %p109
        %p261 = pneg %p106
        %s262 = smul.u32 4, %s20
        %p263 = scmp.lt.s32.totalorder %s262, 7
        %s264 = scalar_select %p263, %s262, 7
        %s265 = smul.addr %s264, 8
        %s266 = scalar_lea.vmem %s4, %s265
        %p267 = pneg %p135
        %p268 = pneg %p132
        %p269 = pneg %p156
        %p270 = pneg %p153
        %p271 = pneg %p182
        %p272 = pneg %p179
        %s273 = sand.u32 %s169, 1
        %s274 = scalar_lea.sflag [#allocation3], %s273
        %s275 = sand.u32 %s169, 1
        %s276 = smul.addr %s275, 32
        %s277 = scalar_lea.vmem [#allocation2], %s276
        %s278 = smul.u32 4, %s20
        %p279 = scmp.lt.s32.totalorder %s278, 7
        %s280 = scalar_select %p279, %s278, 7
        %s281 = smul.addr %s280, 8
        %s282 = scalar_lea.vmem %s0, %s281
        %s283 = smul.u32 4, %s20
        %s284 = smul.u32 4, %s20
        %p285 = scmp.lt.s32.totalorder %s284, 7
        %s286 = scalar_select %p285, %s284, 7
        %s287 = smul.addr %s286, 8
        %s288 = scalar_lea.vmem %s2, %s287
        %s289 = smul.u32 4, %s20
        %s290 = smul.u32 4, %s20
        %p291 = scmp.lt.s32.totalorder %s290, 7
        %s292 = scalar_select %p291, %s290, 7
        %s293 = smul.addr %s292, 8
        %s294 = scalar_lea.vmem %s4, %s293
        %s295 = smul.u32 4, %s20
        %s296 = smul.u32 4, %s20
        %v297 = vld [vmem:[%s282] sm:$0xff]
        %v298 = vld [vmem:[%s282 + $0x8] sm:$0xff]
        %v299 = vld [vmem:[%s282 + $0x10] sm:$0xff]
        %v300 = vld [vmem:[%s282 + $0x18] sm:$0xff]
        %v301 = vld [vmem:[%s1] sm:$0xff]
        %v302 = vld [vmem:[%s1 + $0x8] sm:$0xff]
        %v303 = vld [vmem:[%s1 + $0x10] sm:$0xff]
        %v304 = vld [vmem:[%s1 + $0x18] sm:$0xff]
        %v305 = vld [vmem:[%s1 + $0x20] sm:$0xff]
        %v306 = vld [vmem:[%s1 + $0x28] sm:$0xff]
        %v307 = vld [vmem:[%s1 + $0x30] sm:$0xff]
        %v308 = vld [vmem:[%s1 + $0x38] sm:$0xff]
        %309 = vmatprep.subr.mxu0 0.0
        %v310 = vand.u32 %v301, 4294901760
        %311 = vmatpush1.xpose.msra.mxu0 %v310
        %312 = vmatprep.subr.mxu0 0.0
        %v313 = vand.u32 %v302, 4294901760
        %314 = vmatpush1.xpose.msra.mxu0 %v313
        %315 = vmatprep.subr.mxu0 0.0
        %v316 = vand.u32 %v303, 4294901760
        %317 = vmatpush1.xpose.msra.mxu0 %v316
        %318 = vmatprep.subr.mxu0 0.0
        %v319 = vand.u32 %v304, 4294901760
        %320 = vmatpush1.xpose.msra.mxu0 %v319
        %321 = vmatprep.subr.mxu0 0.0
        %v322 = vand.u32 %v305, 4294901760
        %323 = vmatpush1.xpose.msra.mxu0 %v322
        %324 = vmatprep.subr.mxu0 0.0
        %v325 = vand.u32 %v306, 4294901760
        %326 = vmatpush1.xpose.msra.mxu0 %v325
        %327 = vmatprep.subr.mxu0 0.0
        %v328 = vand.u32 %v307, 4294901760
        %329 = vmatpush1.xpose.msra.mxu0 %v328
        %330 = vmatprep.subr.mxu0 0.0
        %v331 = vand.u32 %v308, 4294901760
        %332 = vmatpush1.xpose.msra.mxu0 %v331
        %333 = vmatprep.subr.mxu0 0.0
        %334 = vmatpush1.xpose.msra.mxu0 0.0
        %335 = vmatprep.subr.mxu0 0.0
        %336 = vmatpush1.xpose.msra.mxu0 0.0
        %337 = vmatprep.subr.mxu0 0.0
        %338 = vmatpush1.xpose.msra.mxu0 0.0
        %339 = vmatprep.subr.mxu0 0.0
        %340 = vmatpush1.xpose.msra.mxu0 0.0
        %341 = vmatprep.subr.mxu0 0.0
        %342 = vmatpush1.xpose.msra.mxu0 0.0
        %343 = vmatprep.subr.mxu0 0.0
        %344 = vmatpush1.xpose.msra.mxu0 0.0
        %345 = vmatprep.subr.mxu0 0.0
        %346 = vmatpush1.xpose.msra.mxu0 0.0
        %347 = vmatprep.subr.mxu0 0.0
        %348 = vmatpush1.xpose.msra.mxu0 0.0
        %349 = vmatprep.subr.mxu0 0.0
        %350 = vmatpush1.xpose.msra.mxu0 0.0
        %351 = vmatprep.subr.mxu0 0.0
        %352 = vmatpush1.xpose.msra.mxu0 0.0
        %353 = vmatprep.subr.mxu0 0.0
        %354 = vmatpush1.xpose.msra.mxu0 0.0
        %355 = vmatprep.subr.mxu0 0.0
        %356 = vmatpush1.xpose.msra.mxu0 0.0
        %357 = vmatprep.subr.mxu0 0.0
        %358 = vmatpush1.xpose.msra.mxu0 0.0
        %359 = vmatprep.subr.mxu0 0.0
        %360 = vmatpush1.xpose.msra.mxu0 0.0
        %361 = vmatprep.subr.mxu0 0.0
        %362 = vmatpush1.xpose.msra.mxu0 0.0
        %363 = vmatprep.subr.mxu0 0.0
        %364 = vmatpush1.xpose.msra.mxu0 0.0
        %365 = vmatprep.subr.mxu0 0.0
        %366 = vmatpush1.xpose.msra.mxu0 0.0
        %367 = vmatprep.subr.mxu0 0.0
        %368 = vmatpush1.xpose.msra.mxu0 0.0
        %369 = vmatprep.subr.mxu0 0.0
        %370 = vmatpush1.xpose.msra.mxu0 0.0
        %371 = vmatprep.subr.mxu0 0.0
        %372 = vmatpush1.xpose.msra.mxu0 0.0
        %373 = vmatprep.subr.mxu0 0.0
        %374 = vmatpush1.xpose.msra.mxu0 0.0
        %375 = vmatprep.subr.mxu0 0.0
        %376 = vmatpush1.xpose.msra.mxu0 0.0
        %377 = vmatprep.subr.mxu0 0.0
        %378 = vmatpush1.xpose.msra.mxu0 0.0
        %379 = vmatprep.subr.mxu0 0.0
        %380 = vmatpush1.xpose.msra.mxu0 0.0
        %381 = vmatprep.mubr.f32.mxu0 0.0
        %v382 = vand.u32 %v297, 4294901760
        %v383 = vsub.f32 %v297, %v382
        %v384 = vand.u32 %v383, 4294901760
        %v385 = vsub.f32 %v383, %v384
        %v386 = vand.u32 %v385, 4294901760
        %387 = vmatmul.mubr.f32.gmra.mrb[0].mxu0 %v386
        %v388 = vpop.f32.mrb[0].mxu0
        %v389 = vadd.f32 0.0, %v388
        %v390 = vpop.f32.mrb[0].mxu0
        %391 = vmatprep.mubr.f32.mxu0 0.0
        %v392 = vand.u32 %v298, 4294901760
        %v393 = vsub.f32 %v298, %v392
        %v394 = vand.u32 %v393, 4294901760
        %v395 = vsub.f32 %v393, %v394
        %v396 = vand.u32 %v395, 4294901760
        %397 = vmatmul.mubr.f32.gmra.mrb[0].mxu0 %v396
        %v398 = vpop.f32.mrb[0].mxu0
        %v399 = vadd.f32 0.0, %v398
        %v400 = vpop.f32.mrb[0].mxu0
        %401 = vmatprep.mubr.f32.mxu0 0.0
        %v402 = vand.u32 %v299, 4294901760
        %v403 = vsub.f32 %v299, %v402
        %v404 = vand.u32 %v403, 4294901760
        %v405 = vsub.f32 %v403, %v404
        %v406 = vand.u32 %v405, 4294901760
        %407 = vmatmul.mubr.f32.gmra.mrb[0].mxu0 %v406
        %v408 = vpop.f32.mrb[0].mxu0
        %v409 = vadd.f32 0.0, %v408
        %v410 = vpop.f32.mrb[0].mxu0
        %411 = vmatprep.mubr.f32.mxu0 0.0
        %v412 = vand.u32 %v300, 4294901760
        %v413 = vsub.f32 %v300, %v412
        %v414 = vand.u32 %v413, 4294901760
        %v415 = vsub.f32 %v413, %v414
        %v416 = vand.u32 %v415, 4294901760
        %417 = vmatmul.mubr.f32.gmra.mrb[0].mxu0 %v416
        %v418 = vpop.f32.mrb[0].mxu0
        %v419 = vadd.f32 0.0, %v418
        %v420 = vpop.f32.mrb[0].mxu0
        %421 = vdwg.mxu0
        %422 = vmatprep.subr.mxu0 0.0
        %v423 = vand.u32 %v301, 4294901760
        %v424 = vsub.f32 %v301, %v423
        %v425 = vand.u32 %v424, 4294901760
        %v426 = vsub.f32 %v424, %v425
        %v427 = vand.u32 %v426, 4294901760
        %428 = vmatpush1.xpose.msra.mxu0 %v427
        %429 = vmatprep.subr.mxu0 0.0
        %v430 = vand.u32 %v302, 4294901760
        %v431 = vsub.f32 %v302, %v430
        %v432 = vand.u32 %v431, 4294901760
        %v433 = vsub.f32 %v431, %v432
        %v434 = vand.u32 %v433, 4294901760
        %435 = vmatpush1.xpose.msra.mxu0 %v434
        %436 = vmatprep.subr.mxu0 0.0
        %v437 = vand.u32 %v303, 4294901760
        %v438 = vsub.f32 %v303, %v437
        %v439 = vand.u32 %v438, 4294901760
        %v440 = vsub.f32 %v438, %v439
        %v441 = vand.u32 %v440, 4294901760
        %442 = vmatpush1.xpose.msra.mxu0 %v441
        %443 = vmatprep.subr.mxu0 0.0
        %v444 = vand.u32 %v304, 4294901760
        %v445 = vsub.f32 %v304, %v444
        %v446 = vand.u32 %v445, 4294901760
        %v447 = vsub.f32 %v445, %v446
        %v448 = vand.u32 %v447, 4294901760
        %449 = vmatpush1.xpose.msra.mxu0 %v448
        %450 = vmatprep.subr.mxu0 0.0
        %v451 = vand.u32 %v305, 4294901760
        %v452 = vsub.f32 %v305, %v451
        %v453 = vand.u32 %v452, 4294901760
        %v454 = vsub.f32 %v452, %v453
        %v455 = vand.u32 %v454, 4294901760
        %456 = vmatpush1.xpose.msra.mxu0 %v455
        %457 = vmatprep.subr.mxu0 0.0
        %v458 = vand.u32 %v306, 4294901760
        %v459 = vsub.f32 %v306, %v458
        %v460 = vand.u32 %v459, 4294901760
        %v461 = vsub.f32 %v459, %v460
        %v462 = vand.u32 %v461, 4294901760
        %463 = vmatpush1.xpose.msra.mxu0 %v462
        %464 = vmatprep.subr.mxu0 0.0
        %v465 = vand.u32 %v307, 4294901760
        %v466 = vsub.f32 %v307, %v465
        %v467 = vand.u32 %v466, 4294901760
        %v468 = vsub.f32 %v466, %v467
        %v469 = vand.u32 %v468, 4294901760
        %470 = vmatpush1.xpose.msra.mxu0 %v469
        %471 = vmatprep.subr.mxu0 0.0
        %v472 = vand.u32 %v308, 4294901760
        %v473 = vsub.f32 %v308, %v472
        %v474 = vand.u32 %v473, 4294901760
        %v475 = vsub.f32 %v473, %v474
        %v476 = vand.u32 %v475, 4294901760
        %477 = vmatpush1.xpose.msra.mxu0 %v476
        %478 = vmatprep.subr.mxu0 0.0
        %479 = vmatpush1.xpose.msra.mxu0 0.0
        %480 = vmatprep.subr.mxu0 0.0
        %481 = vmatpush1.xpose.msra.mxu0 0.0
        %482 = vmatprep.subr.mxu0 0.0
        %483 = vmatpush1.xpose.msra.mxu0 0.0
        %484 = vmatprep.subr.mxu0 0.0
        %485 = vmatpush1.xpose.msra.mxu0 0.0
        %486 = vmatprep.subr.mxu0 0.0
        %487 = vmatpush1.xpose.msra.mxu0 0.0
        %488 = vmatprep.subr.mxu0 0.0
        %489 = vmatpush1.xpose.msra.mxu0 0.0
        %490 = vmatprep.subr.mxu0 0.0
        %491 = vmatpush1.xpose.msra.mxu0 0.0
        %492 = vmatprep.subr.mxu0 0.0
        %493 = vmatpush1.xpose.msra.mxu0 0.0
        %494 = vmatprep.subr.mxu0 0.0
        %495 = vmatpush1.xpose.msra.mxu0 0.0
        %496 = vmatprep.subr.mxu0 0.0
        %497 = vmatpush1.xpose.msra.mxu0 0.0
        %498 = vmatprep.subr.mxu0 0.0
        %499 = vmatpush1.xpose.msra.mxu0 0.0
        %500 = vmatprep.subr.mxu0 0.0
        %501 = vmatpush1.xpose.msra.mxu0 0.0
        %502 = vmatprep.subr.mxu0 0.0
        %503 = vmatpush1.xpose.msra.mxu0 0.0
        %504 = vmatprep.subr.mxu0 0.0
        %505 = vmatpush1.xpose.msra.mxu0 0.0
        %506 = vmatprep.subr.mxu0 0.0
        %507 = vmatpush1.xpose.msra.mxu0 0.0
        %508 = vmatprep.subr.mxu0 0.0
        %509 = vmatpush1.xpose.msra.mxu0 0.0
        %510 = vmatprep.subr.mxu0 0.0
        %511 = vmatpush1.xpose.msra.mxu0 0.0
        %512 = vmatprep.subr.mxu0 0.0
        %513 = vmatpush1.xpose.msra.mxu0 0.0
        %514 = vmatprep.subr.mxu0 0.0
        %515 = vmatpush1.xpose.msra.mxu0 0.0
        %516 = vmatprep.subr.mxu0 0.0
        %517 = vmatpush1.xpose.msra.mxu0 0.0
        %518 = vmatprep.subr.mxu0 0.0
        %519 = vmatpush1.xpose.msra.mxu0 0.0
        %520 = vmatprep.subr.mxu0 0.0
        %521 = vmatpush1.xpose.msra.mxu0 0.0
        %522 = vmatprep.subr.mxu0 0.0
        %523 = vmatpush1.xpose.msra.mxu0 0.0
        %524 = vmatprep.subr.mxu0 0.0
        %525 = vmatpush1.xpose.msra.mxu0 0.0
        %526 = vmatprep.mubr.f32.mxu0 0.0
        %v527 = vand.u32 %v297, 4294901760
        %528 = vmatmul.mubr.f32.gmra.mrb[0].mxu0 %v527
        %v529 = vpop.f32.mrb[0].mxu0
        %v530 = vadd.f32 %v389, %v529
        %v531 = vpop.f32.mrb[0].mxu0
        %532 = vmatprep.mubr.f32.mxu0 0.0
        %v533 = vand.u32 %v298, 4294901760
        %534 = vmatmul.mubr.f32.gmra.mrb[0].mxu0 %v533
        %v535 = vpop.f32.mrb[0].mxu0
        %v536 = vadd.f32 %v399, %v535
        %v537 = vpop.f32.mrb[0].mxu0
        %538 = vmatprep.mubr.f32.mxu0 0.0
        %v539 = vand.u32 %v299, 4294901760
        %540 = vmatmul.mubr.f32.gmra.mrb[0].mxu0 %v539
        %v541 = vpop.f32.mrb[0].mxu0
        %v542 = vadd.f32 %v409, %v541
        %v543 = vpop.f32.mrb[0].mxu0
        %544 = vmatprep.mubr.f32.mxu0 0.0
        %v545 = vand.u32 %v300, 4294901760
        %546 = vmatmul.mubr.f32.gmra.mrb[0].mxu0 %v545
        %v547 = vpop.f32.mrb[0].mxu0
        %v548 = vadd.f32 %v419, %v547
        %v549 = vpop.f32.mrb[0].mxu0
        %550 = vdwg.mxu0
        %551 = vmatprep.subr.mxu0 0.0
        %v552 = vand.u32 %v301, 4294901760
        %v553 = vsub.f32 %v301, %v552
        %554 = vmatpush1.xpose.msra.mxu0 %v553
        %555 = vmatprep.subr.mxu0 0.0
        %v556 = vand.u32 %v302, 4294901760
        %v557 = vsub.f32 %v302, %v556
        %558 = vmatpush1.xpose.msra.mxu0 %v557
        %559 = vmatprep.subr.mxu0 0.0
        %v560 = vand.u32 %v303, 4294901760
        %v561 = vsub.f32 %v303, %v560
        %562 = vmatpush1.xpose.msra.mxu0 %v561
        %563 = vmatprep.subr.mxu0 0.0
        %v564 = vand.u32 %v304, 4294901760
        %v565 = vsub.f32 %v304, %v564
        %566 = vmatpush1.xpose.msra.mxu0 %v565
        %567 = vmatprep.subr.mxu0 0.0
        %v568 = vand.u32 %v305, 4294901760
        %v569 = vsub.f32 %v305, %v568
        %570 = vmatpush1.xpose.msra.mxu0 %v569
        %571 = vmatprep.subr.mxu0 0.0
        %v572 = vand.u32 %v306, 4294901760
        %v573 = vsub.f32 %v306, %v572
        %574 = vmatpush1.xpose.msra.mxu0 %v573
        %575 = vmatprep.subr.mxu0 0.0
        %v576 = vand.u32 %v307, 4294901760
        %v577 = vsub.f32 %v307, %v576
        %578 = vmatpush1.xpose.msra.mxu0 %v577
        %579 = vmatprep.subr.mxu0 0.0
        %v580 = vand.u32 %v308, 4294901760
        %v581 = vsub.f32 %v308, %v580
        %582 = vmatpush1.xpose.msra.mxu0 %v581
        %583 = vmatprep.subr.mxu0 0.0
        %584 = vmatpush1.xpose.msra.mxu0 0.0
        %585 = vmatprep.subr.mxu0 0.0
        %586 = vmatpush1.xpose.msra.mxu0 0.0
        %587 = vmatprep.subr.mxu0 0.0
        %588 = vmatpush1.xpose.msra.mxu0 0.0
        %589 = vmatprep.subr.mxu0 0.0
        %590 = vmatpush1.xpose.msra.mxu0 0.0
        %591 = vmatprep.subr.mxu0 0.0
        %592 = vmatpush1.xpose.msra.mxu0 0.0
        %593 = vmatprep.subr.mxu0 0.0
        %594 = vmatpush1.xpose.msra.mxu0 0.0
        %595 = vmatprep.subr.mxu0 0.0
        %596 = vmatpush1.xpose.msra.mxu0 0.0
        %597 = vmatprep.subr.mxu0 0.0
        %598 = vmatpush1.xpose.msra.mxu0 0.0
        %599 = vmatprep.subr.mxu0 0.0
        %600 = vmatpush1.xpose.msra.mxu0 0.0
        %601 = vmatprep.subr.mxu0 0.0
        %602 = vmatpush1.xpose.msra.mxu0 0.0
        %603 = vmatprep.subr.mxu0 0.0
        %604 = vmatpush1.xpose.msra.mxu0 0.0
        %605 = vmatprep.subr.mxu0 0.0
        %606 = vmatpush1.xpose.msra.mxu0 0.0
        %607 = vmatprep.subr.mxu0 0.0
        %608 = vmatpush1.xpose.msra.mxu0 0.0
        %609 = vmatprep.subr.mxu0 0.0
        %610 = vmatpush1.xpose.msra.mxu0 0.0
        %611 = vmatprep.subr.mxu0 0.0
        %612 = vmatpush1.xpose.msra.mxu0 0.0
        %613 = vmatprep.subr.mxu0 0.0
        %614 = vmatpush1.xpose.msra.mxu0 0.0
        %615 = vmatprep.subr.mxu0 0.0
        %616 = vmatpush1.xpose.msra.mxu0 0.0
        %617 = vmatprep.subr.mxu0 0.0
        %618 = vmatpush1.xpose.msra.mxu0 0.0
        %619 = vmatprep.subr.mxu0 0.0
        %620 = vmatpush1.xpose.msra.mxu0 0.0
        %621 = vmatprep.subr.mxu0 0.0
        %622 = vmatpush1.xpose.msra.mxu0 0.0
        %623 = vmatprep.subr.mxu0 0.0
        %624 = vmatpush1.xpose.msra.mxu0 0.0
        %625 = vmatprep.subr.mxu0 0.0
        %626 = vmatpush1.xpose.msra.mxu0 0.0
        %627 = vmatprep.subr.mxu0 0.0
        %628 = vmatpush1.xpose.msra.mxu0 0.0
        %629 = vmatprep.subr.mxu0 0.0
        %630 = vmatpush1.xpose.msra.mxu0 0.0
        %631 = vmatprep.mubr.f32.mxu0 0.0
        %v632 = vand.u32 %v297, 4294901760
        %v633 = vsub.f32 %v297, %v632
        %634 = vmatmul.mubr.f32.gmra.mrb[0].mxu0 %v633
        %v635 = vpop.f32.mrb[0].mxu0
        %v636 = vadd.f32 %v530, %v635
        %v637 = vpop.f32.mrb[0].mxu0
        %638 = vmatprep.mubr.f32.mxu0 0.0
        %v639 = vand.u32 %v298, 4294901760
        %v640 = vsub.f32 %v298, %v639
        %641 = vmatmul.mubr.f32.gmra.mrb[0].mxu0 %v640
        %v642 = vpop.f32.mrb[0].mxu0
        %v643 = vadd.f32 %v536, %v642
        %v644 = vpop.f32.mrb[0].mxu0
        %645 = vmatprep.mubr.f32.mxu0 0.0
        %v646 = vand.u32 %v299, 4294901760
        %v647 = vsub.f32 %v299, %v646
        %648 = vmatmul.mubr.f32.gmra.mrb[0].mxu0 %v647
        %v649 = vpop.f32.mrb[0].mxu0
        %v650 = vadd.f32 %v542, %v649
        %v651 = vpop.f32.mrb[0].mxu0
        %652 = vmatprep.mubr.f32.mxu0 0.0
        %v653 = vand.u32 %v300, 4294901760
        %v654 = vsub.f32 %v300, %v653
        %655 = vmatmul.mubr.f32.gmra.mrb[0].mxu0 %v654
        %v656 = vpop.f32.mrb[0].mxu0
        %v657 = vadd.f32 %v548, %v656
        %v658 = vpop.f32.mrb[0].mxu0
        %659 = vdwg.mxu0
        %660 = vmatprep.subr.mxu0 0.0
        %v661 = vand.u32 %v301, 4294901760
        %662 = vmatpush1.xpose.msra.mxu0 %v661
        %663 = vmatprep.subr.mxu0 0.0
        %v664 = vand.u32 %v302, 4294901760
        %665 = vmatpush1.xpose.msra.mxu0 %v664
        %666 = vmatprep.subr.mxu0 0.0
        %v667 = vand.u32 %v303, 4294901760
        %668 = vmatpush1.xpose.msra.mxu0 %v667
        %669 = vmatprep.subr.mxu0 0.0
        %v670 = vand.u32 %v304, 4294901760
        %671 = vmatpush1.xpose.msra.mxu0 %v670
        %672 = vmatprep.subr.mxu0 0.0
        %v673 = vand.u32 %v305, 4294901760
        %674 = vmatpush1.xpose.msra.mxu0 %v673
        %675 = vmatprep.subr.mxu0 0.0
        %v676 = vand.u32 %v306, 4294901760
        %677 = vmatpush1.xpose.msra.mxu0 %v676
        %678 = vmatprep.subr.mxu0 0.0
        %v679 = vand.u32 %v307, 4294901760
        %680 = vmatpush1.xpose.msra.mxu0 %v679
        %681 = vmatprep.subr.mxu0 0.0
        %v682 = vand.u32 %v308, 4294901760
        %683 = vmatpush1.xpose.msra.mxu0 %v682
        %684 = vmatprep.subr.mxu0 0.0
        %685 = vmatpush1.xpose.msra.mxu0 0.0
        %686 = vmatprep.subr.mxu0 0.0
        %687 = vmatpush1.xpose.msra.mxu0 0.0
        %688 = vmatprep.subr.mxu0 0.0
        %689 = vmatpush1.xpose.msra.mxu0 0.0
        %690 = vmatprep.subr.mxu0 0.0
        %691 = vmatpush1.xpose.msra.mxu0 0.0
        %692 = vmatprep.subr.mxu0 0.0
        %693 = vmatpush1.xpose.msra.mxu0 0.0
        %694 = vmatprep.subr.mxu0 0.0
        %695 = vmatpush1.xpose.msra.mxu0 0.0
        %696 = vmatprep.subr.mxu0 0.0
        %697 = vmatpush1.xpose.msra.mxu0 0.0
        %698 = vmatprep.subr.mxu0 0.0
        %699 = vmatpush1.xpose.msra.mxu0 0.0
        %700 = vmatprep.subr.mxu0 0.0
        %701 = vmatpush1.xpose.msra.mxu0 0.0
        %702 = vmatprep.subr.mxu0 0.0
        %703 = vmatpush1.xpose.msra.mxu0 0.0
        %704 = vmatprep.subr.mxu0 0.0
        %705 = vmatpush1.xpose.msra.mxu0 0.0
        %706 = vmatprep.subr.mxu0 0.0
        %707 = vmatpush1.xpose.msra.mxu0 0.0
        %708 = vmatprep.subr.mxu0 0.0
        %709 = vmatpush1.xpose.msra.mxu0 0.0
        %710 = vmatprep.subr.mxu0 0.0
        %711 = vmatpush1.xpose.msra.mxu0 0.0
        %712 = vmatprep.subr.mxu0 0.0
        %713 = vmatpush1.xpose.msra.mxu0 0.0
        %714 = vmatprep.subr.mxu0 0.0
        %715 = vmatpush1.xpose.msra.mxu0 0.0
        %716 = vmatprep.subr.mxu0 0.0
        %717 = vmatpush1.xpose.msra.mxu0 0.0
        %718 = vmatprep.subr.mxu0 0.0
        %719 = vmatpush1.xpose.msra.mxu0 0.0
        %720 = vmatprep.subr.mxu0 0.0
        %721 = vmatpush1.xpose.msra.mxu0 0.0
        %722 = vmatprep.subr.mxu0 0.0
        %723 = vmatpush1.xpose.msra.mxu0 0.0
        %724 = vmatprep.subr.mxu0 0.0
        %725 = vmatpush1.xpose.msra.mxu0 0.0
        %726 = vmatprep.subr.mxu0 0.0
        %727 = vmatpush1.xpose.msra.mxu0 0.0
        %728 = vmatprep.subr.mxu0 0.0
        %729 = vmatpush1.xpose.msra.mxu0 0.0
        %730 = vmatprep.subr.mxu0 0.0
        %731 = vmatpush1.xpose.msra.mxu0 0.0
        %732 = vmatprep.mubr.f32.mxu0 0.0
        %v733 = vand.u32 %v297, 4294901760
        %v734 = vsub.f32 %v297, %v733
        %v735 = vand.u32 %v734, 4294901760
        %736 = vmatmul.mubr.f32.gmra.mrb[0].mxu0 %v735
        %v737 = vpop.f32.mrb[0].mxu0
        %v738 = vadd.f32 %v636, %v737
        %v739 = vpop.f32.mrb[0].mxu0
        %740 = vmatprep.mubr.f32.mxu0 0.0
        %v741 = vand.u32 %v298, 4294901760
        %v742 = vsub.f32 %v298, %v741
        %v743 = vand.u32 %v742, 4294901760
        %744 = vmatmul.mubr.f32.gmra.mrb[0].mxu0 %v743
        %v745 = vpop.f32.mrb[0].mxu0
        %v746 = vadd.f32 %v643, %v745
        %v747 = vpop.f32.mrb[0].mxu0
        %748 = vmatprep.mubr.f32.mxu0 0.0
        %v749 = vand.u32 %v299, 4294901760
        %v750 = vsub.f32 %v299, %v749
        %v751 = vand.u32 %v750, 4294901760
        %752 = vmatmul.mubr.f32.gmra.mrb[0].mxu0 %v751
        %v753 = vpop.f32.mrb[0].mxu0
        %v754 = vadd.f32 %v650, %v753
        %v755 = vpop.f32.mrb[0].mxu0
        %756 = vmatprep.mubr.f32.mxu0 0.0
        %v757 = vand.u32 %v300, 4294901760
        %v758 = vsub.f32 %v300, %v757
        %v759 = vand.u32 %v758, 4294901760
        %760 = vmatmul.mubr.f32.gmra.mrb[0].mxu0 %v759
        %v761 = vpop.f32.mrb[0].mxu0
        %v762 = vadd.f32 %v657, %v761
        %v763 = vpop.f32.mrb[0].mxu0
        %764 = vdwg.mxu0
        %765 = vmatprep.subr.mxu0 0.0
        %v766 = vand.u32 %v301, 4294901760
        %v767 = vsub.f32 %v301, %v766
        %v768 = vand.u32 %v767, 4294901760
        %769 = vmatpush1.xpose.msra.mxu0 %v768
        %770 = vmatprep.subr.mxu0 0.0
        %v771 = vand.u32 %v302, 4294901760
        %v772 = vsub.f32 %v302, %v771
        %v773 = vand.u32 %v772, 4294901760
        %774 = vmatpush1.xpose.msra.mxu0 %v773
        %775 = vmatprep.subr.mxu0 0.0
        %v776 = vand.u32 %v303, 4294901760
        %v777 = vsub.f32 %v303, %v776
        %v778 = vand.u32 %v777, 4294901760
        %779 = vmatpush1.xpose.msra.mxu0 %v778
        %780 = vmatprep.subr.mxu0 0.0
        %v781 = vand.u32 %v304, 4294901760
        %v782 = vsub.f32 %v304, %v781
        %v783 = vand.u32 %v782, 4294901760
        %784 = vmatpush1.xpose.msra.mxu0 %v783
        %785 = vmatprep.subr.mxu0 0.0
        %v786 = vand.u32 %v305, 4294901760
        %v787 = vsub.f32 %v305, %v786
        %v788 = vand.u32 %v787, 4294901760
        %789 = vmatpush1.xpose.msra.mxu0 %v788
        %790 = vmatprep.subr.mxu0 0.0
        %v791 = vand.u32 %v306, 4294901760
        %v792 = vsub.f32 %v306, %v791
        %v793 = vand.u32 %v792, 4294901760
        %794 = vmatpush1.xpose.msra.mxu0 %v793
        %795 = vmatprep.subr.mxu0 0.0
        %v796 = vand.u32 %v307, 4294901760
        %v797 = vsub.f32 %v307, %v796
        %v798 = vand.u32 %v797, 4294901760
        %799 = vmatpush1.xpose.msra.mxu0 %v798
        %800 = vmatprep.subr.mxu0 0.0
        %v801 = vand.u32 %v308, 4294901760
        %v802 = vsub.f32 %v308, %v801
        %v803 = vand.u32 %v802, 4294901760
        %804 = vmatpush1.xpose.msra.mxu0 %v803
        %805 = vmatprep.subr.mxu0 0.0
        %806 = vmatpush1.xpose.msra.mxu0 0.0
        %807 = vmatprep.subr.mxu0 0.0
        %808 = vmatpush1.xpose.msra.mxu0 0.0
        %809 = vmatprep.subr.mxu0 0.0
        %810 = vmatpush1.xpose.msra.mxu0 0.0
        %811 = vmatprep.subr.mxu0 0.0
        %812 = vmatpush1.xpose.msra.mxu0 0.0
        %813 = vmatprep.subr.mxu0 0.0
        %814 = vmatpush1.xpose.msra.mxu0 0.0
        %815 = vmatprep.subr.mxu0 0.0
        %816 = vmatpush1.xpose.msra.mxu0 0.0
        %817 = vmatprep.subr.mxu0 0.0
        %818 = vmatpush1.xpose.msra.mxu0 0.0
        %819 = vmatprep.subr.mxu0 0.0
        %820 = vmatpush1.xpose.msra.mxu0 0.0
        %821 = vmatprep.subr.mxu0 0.0
        %822 = vmatpush1.xpose.msra.mxu0 0.0
        %823 = vmatprep.subr.mxu0 0.0
        %824 = vmatpush1.xpose.msra.mxu0 0.0
        %825 = vmatprep.subr.mxu0 0.0
        %826 = vmatpush1.xpose.msra.mxu0 0.0
        %827 = vmatprep.subr.mxu0 0.0
        %828 = vmatpush1.xpose.msra.mxu0 0.0
        %829 = vmatprep.subr.mxu0 0.0
        %830 = vmatpush1.xpose.msra.mxu0 0.0
        %831 = vmatprep.subr.mxu0 0.0
        %832 = vmatpush1.xpose.msra.mxu0 0.0
        %833 = vmatprep.subr.mxu0 0.0
        %834 = vmatpush1.xpose.msra.mxu0 0.0
        %835 = vmatprep.subr.mxu0 0.0
        %836 = vmatpush1.xpose.msra.mxu0 0.0
        %837 = vmatprep.subr.mxu0 0.0
        %838 = vmatpush1.xpose.msra.mxu0 0.0
        %839 = vmatprep.subr.mxu0 0.0
        %840 = vmatpush1.xpose.msra.mxu0 0.0
        %841 = vmatprep.subr.mxu0 0.0
        %842 = vmatpush1.xpose.msra.mxu0 0.0
        %843 = vmatprep.subr.mxu0 0.0
        %844 = vmatpush1.xpose.msra.mxu0 0.0
        %845 = vmatprep.subr.mxu0 0.0
        %846 = vmatpush1.xpose.msra.mxu0 0.0
        %847 = vmatprep.subr.mxu0 0.0
        %848 = vmatpush1.xpose.msra.mxu0 0.0
        %849 = vmatprep.subr.mxu0 0.0
        %850 = vmatpush1.xpose.msra.mxu0 0.0
        %851 = vmatprep.subr.mxu0 0.0
        %852 = vmatpush1.xpose.msra.mxu0 0.0
        %853 = vmatprep.mubr.f32.mxu0 0.0
        %v854 = vand.u32 %v297, 4294901760
        %855 = vmatmul.mubr.f32.gmra.mrb[0].mxu0 %v854
        %v856 = vpop.f32.mrb[0].mxu0
        %v857 = vadd.f32 %v738, %v856
        %v858 = vpop.f32.mrb[0].mxu0
        %859 = vmatprep.mubr.f32.mxu0 0.0
        %v860 = vand.u32 %v298, 4294901760
        %861 = vmatmul.mubr.f32.gmra.mrb[0].mxu0 %v860
        %v862 = vpop.f32.mrb[0].mxu0
        %v863 = vadd.f32 %v746, %v862
        %v864 = vpop.f32.mrb[0].mxu0
        %865 = vmatprep.mubr.f32.mxu0 0.0
        %v866 = vand.u32 %v299, 4294901760
        %867 = vmatmul.mubr.f32.gmra.mrb[0].mxu0 %v866
        %v868 = vpop.f32.mrb[0].mxu0
        %v869 = vadd.f32 %v754, %v868
        %v870 = vpop.f32.mrb[0].mxu0
        %871 = vmatprep.mubr.f32.mxu0 0.0
        %v872 = vand.u32 %v300, 4294901760
        %873 = vmatmul.mubr.f32.gmra.mrb[0].mxu0 %v872
        %v874 = vpop.f32.mrb[0].mxu0
        %v875 = vadd.f32 %v762, %v874
        %v876 = vpop.f32.mrb[0].mxu0
        %877 = vdwg.mxu0
        %878 = vmatprep.subr.mxu0 0.0
        %v879 = vand.u32 %v301, 4294901760
        %880 = vmatpush1.xpose.msra.mxu0 %v879
        %881 = vmatprep.subr.mxu0 0.0
        %v882 = vand.u32 %v302, 4294901760
        %883 = vmatpush1.xpose.msra.mxu0 %v882
        %884 = vmatprep.subr.mxu0 0.0
        %v885 = vand.u32 %v303, 4294901760
        %886 = vmatpush1.xpose.msra.mxu0 %v885
        %887 = vmatprep.subr.mxu0 0.0
        %v888 = vand.u32 %v304, 4294901760
        %889 = vmatpush1.xpose.msra.mxu0 %v888
        %890 = vmatprep.subr.mxu0 0.0
        %v891 = vand.u32 %v305, 4294901760
        %892 = vmatpush1.xpose.msra.mxu0 %v891
        %893 = vmatprep.subr.mxu0 0.0
        %v894 = vand.u32 %v306, 4294901760
        %895 = vmatpush1.xpose.msra.mxu0 %v894
        %896 = vmatprep.subr.mxu0 0.0
        %v897 = vand.u32 %v307, 4294901760
        %898 = vmatpush1.xpose.msra.mxu0 %v897
        %899 = vmatprep.subr.mxu0 0.0
        %v900 = vand.u32 %v308, 4294901760
        %901 = vmatpush1.xpose.msra.mxu0 %v900
        %902 = vmatprep.subr.mxu0 0.0
        %903 = vmatpush1.xpose.msra.mxu0 0.0
        %904 = vmatprep.subr.mxu0 0.0
        %905 = vmatpush1.xpose.msra.mxu0 0.0
        %906 = vmatprep.subr.mxu0 0.0
        %907 = vmatpush1.xpose.msra.mxu0 0.0
        %908 = vmatprep.subr.mxu0 0.0
        %909 = vmatpush1.xpose.msra.mxu0 0.0
        %910 = vmatprep.subr.mxu0 0.0
        %911 = vmatpush1.xpose.msra.mxu0 0.0
        %912 = vmatprep.subr.mxu0 0.0
        %913 = vmatpush1.xpose.msra.mxu0 0.0
        %914 = vmatprep.subr.mxu0 0.0
        %915 = vmatpush1.xpose.msra.mxu0 0.0
        %916 = vmatprep.subr.mxu0 0.0
        %917 = vmatpush1.xpose.msra.mxu0 0.0
        %918 = vmatprep.subr.mxu0 0.0
        %919 = vmatpush1.xpose.msra.mxu0 0.0
        %920 = vmatprep.subr.mxu0 0.0
        %921 = vmatpush1.xpose.msra.mxu0 0.0
        %922 = vmatprep.subr.mxu0 0.0
        %923 = vmatpush1.xpose.msra.mxu0 0.0
        %924 = vmatprep.subr.mxu0 0.0
        %925 = vmatpush1.xpose.msra.mxu0 0.0
        %926 = vmatprep.subr.mxu0 0.0
        %927 = vmatpush1.xpose.msra.mxu0 0.0
        %928 = vmatprep.subr.mxu0 0.0
        %929 = vmatpush1.xpose.msra.mxu0 0.0
        %930 = vmatprep.subr.mxu0 0.0
        %931 = vmatpush1.xpose.msra.mxu0 0.0
        %932 = vmatprep.subr.mxu0 0.0
        %933 = vmatpush1.xpose.msra.mxu0 0.0
        %934 = vmatprep.subr.mxu0 0.0
        %935 = vmatpush1.xpose.msra.mxu0 0.0
        %936 = vmatprep.subr.mxu0 0.0
        %937 = vmatpush1.xpose.msra.mxu0 0.0
        %938 = vmatprep.subr.mxu0 0.0
        %939 = vmatpush1.xpose.msra.mxu0 0.0
        %940 = vmatprep.subr.mxu0 0.0
        %941 = vmatpush1.xpose.msra.mxu0 0.0
        %942 = vmatprep.subr.mxu0 0.0
        %943 = vmatpush1.xpose.msra.mxu0 0.0
        %944 = vmatprep.subr.mxu0 0.0
        %945 = vmatpush1.xpose.msra.mxu0 0.0
        %946 = vmatprep.subr.mxu0 0.0
        %947 = vmatpush1.xpose.msra.mxu0 0.0
        %948 = vmatprep.subr.mxu0 0.0
        %949 = vmatpush1.xpose.msra.mxu0 0.0
        %950 = vmatprep.mubr.f32.mxu0 0.0
        %v951 = vand.u32 %v297, 4294901760
        %952 = vmatmul.mubr.f32.gmra.mrb[0].mxu0 %v951
        %v953 = vpop.f32.mrb[0].mxu0
        %v954 = vadd.f32 %v857, %v953
        %v955 = vpop.f32.mrb[0].mxu0
        %956 = vmatprep.mubr.f32.mxu0 0.0
        %v957 = vand.u32 %v298, 4294901760
        %958 = vmatmul.mubr.f32.gmra.mrb[0].mxu0 %v957
        %v959 = vpop.f32.mrb[0].mxu0
        %v960 = vadd.f32 %v863, %v959
        %v961 = vpop.f32.mrb[0].mxu0
        %962 = vmatprep.mubr.f32.mxu0 0.0
        %v963 = vand.u32 %v299, 4294901760
        %964 = vmatmul.mubr.f32.gmra.mrb[0].mxu0 %v963
        %v965 = vpop.f32.mrb[0].mxu0
        %v966 = vadd.f32 %v869, %v965
        %v967 = vpop.f32.mrb[0].mxu0
        %968 = vmatprep.mubr.f32.mxu0 0.0
        %v969 = vand.u32 %v300, 4294901760
        %970 = vmatmul.mubr.f32.gmra.mrb[0].mxu0 %v969
        %v971 = vpop.f32.mrb[0].mxu0
        %v972 = vadd.f32 %v875, %v971
        %v973 = vpop.f32.mrb[0].mxu0
        %974 = vdwg.mxu0
        %v975 = vld [vmem:[%s288] sm:$0xff]
        %v976 = vld [vmem:[%s288 + $0x8] sm:$0xff]
        %v977 = vld [vmem:[%s288 + $0x10] sm:$0xff]
        %v978 = vld [vmem:[%s288 + $0x18] sm:$0xff]
        %v979 = vld [vmem:[%s3] sm:$0x1]
        %981 = vset.pattern.permute.xlu0 0
        %982 = vperm.xlu0 %981, %v975
        %v983 = vpop.permute.xlu0 %982
        %986 = vset.pattern.permute.xlu0 0
        %987 = vperm.xlu0 %986, %v976
        %v988 = vpop.permute.xlu0 %987
        %991 = vset.pattern.permute.xlu0 0
        %992 = vperm.xlu0 %991, %v977
        %v993 = vpop.permute.xlu0 %992
        %996 = vset.pattern.permute.xlu0 0
        %997 = vperm.xlu0 %996, %v978
        %v998 = vpop.permute.xlu0 %997
        %v1001 = vlaneseq
        %v1002 = vshrl.u32 %v1001, 7
        %v1003 = vsub.s32 0, %v1002
        %v1004 = vrot.slane %v979, %v1003
        %v1006 = vadd.f32 %v983, %v1004
        %v1007 = vadd.f32 %v988, %v1004
        %v1008 = vadd.f32 %v993, %v1004
        %v1009 = vadd.f32 %v998, %v1004
        %v1010 = vmul.f32 %v954, 2.0
        %v1011 = vmul.f32 %v960, 2.0
        %v1012 = vmul.f32 %v966, 2.0
        %v1013 = vmul.f32 %v972, 2.0
        %v1014 = vsub.f32 %v1006, %v1010
        %v1015 = vsub.f32 %v1007, %v1011
        %v1016 = vsub.f32 %v1008, %v1012
        %v1017 = vsub.f32 %v1009, %v1013
        %v1018 = vmax.f32 %v1014, 1e-12
        %v1019 = vmax.f32 %v1015, 1e-12
        %v1020 = vmax.f32 %v1016, 1e-12
        %v1021 = vmax.f32 %v1017, 1e-12
        %v1022 = vrsqrt.pop %v1018
        %v1023 = vmul.f32 %v1018, %v1022
        %vm1024 = vcmp.eq.f32.partialorder %v1018, inf
        %v1025 = vsel %vm1024, %v1018, %v1023
        %vm1026 = vcmp.eq.f32.partialorder %v1018, 0.0
        %v1027 = vand.u32 %v1018, 2147483648
        %v1028 = vsel %vm1026, %v1027, %v1025
        %v1029 = vrsqrt.pop %v1019
        %v1030 = vmul.f32 %v1019, %v1029
        %vm1031 = vcmp.eq.f32.partialorder %v1019, inf
        %v1032 = vsel %vm1031, %v1019, %v1030
        %vm1033 = vcmp.eq.f32.partialorder %v1019, 0.0
        %v1034 = vand.u32 %v1019, 2147483648
        %v1035 = vsel %vm1033, %v1034, %v1032
        %v1036 = vrsqrt.pop %v1020
        %v1037 = vmul.f32 %v1020, %v1036
        %vm1038 = vcmp.eq.f32.partialorder %v1020, inf
        %v1039 = vsel %vm1038, %v1020, %v1037
        %vm1040 = vcmp.eq.f32.partialorder %v1020, 0.0
        %v1041 = vand.u32 %v1020, 2147483648
        %v1042 = vsel %vm1040, %v1041, %v1039
        %v1043 = vrsqrt.pop %v1021
        %v1044 = vmul.f32 %v1021, %v1043
        %vm1045 = vcmp.eq.f32.partialorder %v1021, inf
        %v1046 = vsel %vm1045, %v1021, %v1044
        %vm1047 = vcmp.eq.f32.partialorder %v1021, 0.0
        %v1048 = vand.u32 %v1021, 2147483648
        %v1049 = vsel %vm1047, %v1048, %v1046
        %v1050 = vld [vmem:[%s294] sm:$0xff]
        %v1051 = vld [vmem:[%s294 + $0x8] sm:$0xff]
        %v1052 = vld [vmem:[%s294 + $0x10] sm:$0xff]
        %v1053 = vld [vmem:[%s294 + $0x18] sm:$0xff]
        %v1054 = vld [vmem:[%s5] sm:$0x1]
        %1055 = vset.pattern.permute.xlu0 0
        %1056 = vperm.xlu0 %1055, %v1050
        %v1057 = vpop.permute.xlu0 %1056
        %1058 = vset.pattern.permute.xlu0 0
        %1059 = vperm.xlu0 %1058, %v1051
        %v1060 = vpop.permute.xlu0 %1059
        %1061 = vset.pattern.permute.xlu0 0
        %1062 = vperm.xlu0 %1061, %v1052
        %v1063 = vpop.permute.xlu0 %1062
        %1064 = vset.pattern.permute.xlu0 0
        %1065 = vperm.xlu0 %1064, %v1053
        %v1066 = vpop.permute.xlu0 %1065
        %v1067 = vlaneseq
        %v1068 = vshrl.u32 %v1067, 7
        %v1069 = vsub.s32 0, %v1068
        %v1070 = vrot.slane %v1054, %v1069
        %vm1071 = vcmp.eq.s32.totalorder %v1057, %v1070
        %vm1072 = vcmp.eq.s32.totalorder %v1060, %v1070
        %vm1073 = vcmp.eq.s32.totalorder %v1063, %v1070
        %vm1074 = vcmp.eq.s32.totalorder %v1066, %v1070
        %v1075 = vsel %vm1071, 1, 0
        %v1076 = vsel %vm1072, 1, 0
        %v1077 = vsel %vm1073, 1, 0
        %v1078 = vsel %vm1074, 1, 0
        %v1079 = vcvt.s32.f32 %v1075
        %v1080 = vcvt.s32.f32 %v1076
        %v1081 = vcvt.s32.f32 %v1077
        %v1082 = vcvt.s32.f32 %v1078
        %v1083 = vmul.f32 %v1028, %v1079
        %v1084 = vmul.f32 %v1035, %v1080
        %v1085 = vmul.f32 %v1042, %v1081
        %v1086 = vmul.f32 %v1049, %v1082
        %v1087 = vsub.f32 %v1028, %v1083
        %v1088 = vsub.f32 %v1035, %v1084
        %v1089 = vsub.f32 %v1042, %v1085
        %v1090 = vsub.f32 %v1049, %v1086
        %vm1091 = vcmask 523264
        %v1092 = vsel %vm1091, %v1083, -inf
        %1093 = vmax.xlane.f32.xlu0 %v1092
        %v1094 = vpop.xlane.xlu0 %1093
        %v1095 = vsel %vm1091, %v1084, -inf
        %1096 = vmax.xlane.f32.xlu0 %v1095
        %v1097 = vpop.xlane.xlu0 %1096
        %v1098 = vsel %vm1091, %v1085, -inf
        %1099 = vmax.xlane.f32.xlu0 %v1098
        %v1100 = vpop.xlane.xlu0 %1099
        %v1101 = vsel %vm1091, %v1086, -inf
        %1102 = vmax.xlane.f32.xlu0 %v1101
        %v1103 = vpop.xlane.xlu0 %1102
        %v1104 = vsub.f32 0.0, %v1087
        %v1105 = vsub.f32 0.0, %v1088
        %v1106 = vsub.f32 0.0, %v1089
        %v1107 = vsub.f32 0.0, %v1090
        %v1108 = vsel %vm1091, %v1104, -inf
        %1109 = vmax.xlane.f32.xlu0 %v1108
        %v1110 = vpop.xlane.xlu0 %1109
        %v1111 = vsel %vm1091, %v1105, -inf
        %1112 = vmax.xlane.f32.xlu0 %v1111
        %v1113 = vpop.xlane.xlu0 %1112
        %v1114 = vsel %vm1091, %v1106, -inf
        %1115 = vmax.xlane.f32.xlu0 %v1114
        %v1116 = vpop.xlane.xlu0 %1115
        %v1117 = vsel %vm1091, %v1107, -inf
        %1118 = vmax.xlane.f32.xlu0 %v1117
        %v1119 = vpop.xlane.xlu0 %1118
        %v1120 = vsub.f32 %v1083, %v1094
        %v1121 = vsub.f32 %v1084, %v1097
        %v1122 = vsub.f32 %v1085, %v1100
        %v1123 = vsub.f32 %v1086, %v1103
        %v1124 = vsub.f32 %v1104, %v1110
        %v1125 = vsub.f32 %v1105, %v1113
        %v1126 = vsub.f32 %v1106, %v1116
        %v1127 = vsub.f32 %v1107, %v1119
        %v1128 = vsel %vm1071, %v1120, %v1124
        %v1129 = vsel %vm1072, %v1121, %v1125
        %v1130 = vsel %vm1073, %v1122, %v1126
        %v1131 = vsel %vm1074, %v1123, %v1127
        %v1132 = vmul.f32 %v1128, 1.442695
        %v1133 = vpow.pop %v1132
        %v1134 = vmul.f32 %v1129, 1.442695
        %v1135 = vpow.pop %v1134
        %v1136 = vmul.f32 %v1130, 1.442695
        %v1137 = vpow.pop %v1136
        %v1138 = vmul.f32 %v1131, 1.442695
        %v1139 = vpow.pop %v1138
        %v1140 = vmul.f32 %v1133, %v1079
        %v1141 = vmul.f32 %v1135, %v1080
        %v1142 = vmul.f32 %v1137, %v1081
        %v1143 = vmul.f32 %v1139, %v1082
        %v1144 = vsub.f32 %v1133, %v1140
        %v1145 = vsub.f32 %v1135, %v1141
        %v1146 = vsub.f32 %v1137, %v1142
        %v1147 = vsub.f32 %v1139, %v1143
        %v1148 = vsel %vm1091, %v1140, 0.0
        %1149 = vadd.xlane.f32.xlu0 %v1148
        %v1150 = vpop.xlane.xlu0 %1149
        %v1151 = vsel %vm1091, %v1141, 0.0
        %1152 = vadd.xlane.f32.xlu0 %v1151
        %v1153 = vpop.xlane.xlu0 %1152
        %v1154 = vsel %vm1091, %v1142, 0.0
        %1155 = vadd.xlane.f32.xlu0 %v1154
        %v1156 = vpop.xlane.xlu0 %1155
        %v1157 = vsel %vm1091, %v1143, 0.0
        %1158 = vadd.xlane.f32.xlu0 %v1157
        %v1159 = vpop.xlane.xlu0 %1158
        %v1160 = vadd.f32 %v1150, 1e-06
        %v1161 = vadd.f32 %v1153, 1e-06
        %v1162 = vadd.f32 %v1156, 1e-06
        %v1163 = vadd.f32 %v1159, 1e-06
        %v1164 = vsel %vm1091, %v1144, 0.0
        %1165 = vadd.xlane.f32.xlu0 %v1164
        %v1166 = vpop.xlane.xlu0 %1165
        %v1167 = vsel %vm1091, %v1145, 0.0
        %1168 = vadd.xlane.f32.xlu0 %v1167
        %v1169 = vpop.xlane.xlu0 %1168
        %v1170 = vsel %vm1091, %v1146, 0.0
        %1171 = vadd.xlane.f32.xlu0 %v1170
        %v1172 = vpop.xlane.xlu0 %1171
        %v1173 = vsel %vm1091, %v1147, 0.0
        %1174 = vadd.xlane.f32.xlu0 %v1173
        %v1175 = vpop.xlane.xlu0 %1174
        %v1176 = vadd.f32 %v1166, 1e-06
        %v1177 = vadd.f32 %v1169, 1e-06
        %v1178 = vadd.f32 %v1172, 1e-06
        %v1179 = vadd.f32 %v1175, 1e-06
        %v1180 = vmul.f32 %v1083, %v1140
        %v1181 = vmul.f32 %v1084, %v1141
        %v1182 = vmul.f32 %v1085, %v1142
        %v1183 = vmul.f32 %v1086, %v1143
        %v1184 = vsel %vm1091, %v1180, 0.0
        %1185 = vadd.xlane.f32.xlu0 %v1184
        %v1186 = vpop.xlane.xlu0 %1185
        %v1187 = vsel %vm1091, %v1181, 0.0
        %1188 = vadd.xlane.f32.xlu0 %v1187
        %v1189 = vpop.xlane.xlu0 %1188
        %v1190 = vsel %vm1091, %v1182, 0.0
        %1191 = vadd.xlane.f32.xlu0 %v1190
        %v1192 = vpop.xlane.xlu0 %1191
        %v1193 = vsel %vm1091, %v1183, 0.0
        %1194 = vadd.xlane.f32.xlu0 %v1193
        %v1195 = vpop.xlane.xlu0 %1194
        %v1196 = vrcp.pop %v1160
        %v1197 = vmul.f32 %v1186, %v1196
        %v1198 = vrcp.pop %v1161
        %v1199 = vmul.f32 %v1189, %v1198
        %v1200 = vrcp.pop %v1162
        %v1201 = vmul.f32 %v1192, %v1200
        %v1202 = vrcp.pop %v1163
        %v1203 = vmul.f32 %v1195, %v1202
        %v1204 = vmul.f32 %v1087, %v1144
        %v1205 = vmul.f32 %v1088, %v1145
        %v1206 = vmul.f32 %v1089, %v1146
        %v1207 = vmul.f32 %v1090, %v1147
        %v1208 = vsel %vm1091, %v1204, 0.0
        %1209 = vadd.xlane.f32.xlu0 %v1208
        %v1210 = vpop.xlane.xlu0 %1209
        %v1211 = vsel %vm1091, %v1205, 0.0
        %1212 = vadd.xlane.f32.xlu0 %v1211
        %v1213 = vpop.xlane.xlu0 %1212
        %v1214 = vsel %vm1091, %v1206, 0.0
        %1215 = vadd.xlane.f32.xlu0 %v1214
        %v1216 = vpop.xlane.xlu0 %1215
        %v1217 = vsel %vm1091, %v1207, 0.0
        %1218 = vadd.xlane.f32.xlu0 %v1217
        %v1219 = vpop.xlane.xlu0 %1218
        %v1220 = vrcp.pop %v1176
        %v1221 = vmul.f32 %v1210, %v1220
        %v1222 = vrcp.pop %v1177
        %v1223 = vmul.f32 %v1213, %v1222
        %v1224 = vrcp.pop %v1178
        %v1225 = vmul.f32 %v1216, %v1224
        %v1226 = vrcp.pop %v1179
        %v1227 = vmul.f32 %v1219, %v1226
        %v1228 = vsub.f32 %v1221, %v1197
        %v1229 = vsub.f32 %v1223, %v1199
        %v1230 = vsub.f32 %v1225, %v1201
        %v1231 = vsub.f32 %v1227, %v1203
        %v1232 = vsub.f32 0.0, %v1228
        %v1233 = vsub.f32 0.0, %v1229
        %v1234 = vsub.f32 0.0, %v1230
        %v1235 = vsub.f32 0.0, %v1231
        %v1236 = vmax.f32 %v1232, 0.0
        %v1237 = vmax.f32 %v1233, 0.0
        %v1238 = vmax.f32 %v1234, 0.0
        %v1239 = vmax.f32 %v1235, 0.0
        %v1240 = vand.u32 2147483647, %v1228
        %v1241 = vand.u32 2147483647, %v1229
        %v1242 = vand.u32 2147483647, %v1230
        %v1243 = vand.u32 2147483647, %v1231
        %v1244 = vsub.f32 0.0, %v1240
        %v1245 = vsub.f32 0.0, %v1241
        %v1246 = vsub.f32 0.0, %v1242
        %v1247 = vsub.f32 0.0, %v1243
        %v1248 = vmul.f32 %v1244, 1.442695
        %v1249 = vpow.pop %v1248
        %v1250 = vmul.f32 %v1245, 1.442695
        %v1251 = vpow.pop %v1250
        %v1252 = vmul.f32 %v1246, 1.442695
        %v1253 = vpow.pop %v1252
        %v1254 = vmul.f32 %v1247, 1.442695
        %v1255 = vpow.pop %v1254
        %v1256 = vadd.f32 %v1249, 1.0
        %v1257 = vadd.f32 %v1251, 1.0
        %v1258 = vadd.f32 %v1253, 1.0
        %v1259 = vadd.f32 %v1255, 1.0
        %v1260 = vlog2.pop %v1256
        %v1261 = vmul.f32 %v1260, 0.6931472
        %v1262 = vlog2.pop %v1257
        %v1263 = vmul.f32 %v1262, 0.6931472
        %v1264 = vlog2.pop %v1258
        %v1265 = vmul.f32 %v1264, 0.6931472
        %v1266 = vlog2.pop %v1259
        %v1267 = vmul.f32 %v1266, 0.6931472
        %v1268 = vadd.f32 %v1236, %v1261
        %v1269 = vadd.f32 %v1237, %v1263
        %v1270 = vadd.f32 %v1238, %v1265
        %v1271 = vadd.f32 %v1239, %v1267
        %vm1272 = vcmp.ge.f32.partialorder %v1221, %v1197
        %vm1273 = vcmp.ge.f32.partialorder %v1223, %v1199
        %vm1274 = vcmp.ge.f32.partialorder %v1225, %v1201
        %vm1275 = vcmp.ge.f32.partialorder %v1227, %v1203
        %v1276 = vsel %vm1272, 1, 0
        %v1277 = vsel %vm1273, 1, 0
        %v1278 = vsel %vm1274, 1, 0
        %v1279 = vsel %vm1275, 1, 0
        %v1280 = vcvt.s32.f32 %v1276
        %v1281 = vcvt.s32.f32 %v1277
        %v1282 = vcvt.s32.f32 %v1278
        %v1283 = vcvt.s32.f32 %v1279
        %v1284 = vlaneseq
        %v1285 = vand.u32 %v1284, 127
        %vm1286 = vcmp.eq.s32.totalorder %v1285, 0
        %vm1287 = vcmp.eq.s32.totalorder %v1285, 1
        %v1288 = vsel %vm1287, %v1280, 0.0
        %v1289 = vsel %vm1287, %v1281, 0.0
        %v1290 = vsel %vm1287, %v1282, 0.0
        %v1291 = vsel %vm1287, %v1283, 0.0
        %v1292 = vsel %vm1286, %v1268, %v1288
        %v1293 = vsel %vm1286, %v1269, %v1289
        %v1294 = vsel %vm1286, %v1270, %v1290
        %v1295 = vsel %vm1286, %v1271, %v1291
        %1296 = vst [vmem:[%s277] sm:$0xff] %v1292
        %1297 = vst [vmem:[%s277 + $0x8] sm:$0xff] %v1293
        %1298 = vst [vmem:[%s277 + $0x10] sm:$0xff] %v1294
        %1299 = vst [vmem:[%s277 + $0x18] sm:$0xff] %v1295
        %s1300 = sand.u32 %s169, 1
        %s1301 = scalar_lea.sflag [#allocation3], %s1300
        %s1302 = sand.u32 %s169, 1
        %s1303 = smul.addr %s1302, 32
        %s1304 = scalar_lea.vmem [#allocation2], %s1303
        // Predicated region
        $region45: #{tpu_custom_call.1} parent=43 // pred_check
          %p1305 = pneg %p179
        $region46: #{tpu_custom_call.1} parent=43 // pred_check_branch
          %1307 = sbr.rel (%p1305) target = $region48
        $region47: #{tpu_custom_call.1} parent=43 // pred_region
          %s1308 = smul.u32 4, %s20
          %s1310 = ssub.s32 512, 512
          %1311 = vsyncadd %s1301, %s1310
          %s1312 = smul.addr %s1308, 128
          %s1313 = scalar_lea.hbm %s6, %s1312
          %s1314 = sshll.u32 %s1304, 4
          %s1315 = int_to_ptr.vmem [resolvable:$true] %s1314
          %1320 = dma.vmem_to_hbm [thread:$0]  %s1315, 512, %s1313, %s1301, 128, 128, 8
        $region48: #{tpu_custom_call.1} parent=43 // pred_fallthru
          _
      $region44: #{tpu_custom_call.1} parent=5 // pred_fallthru
        _
      %p1321 = scmp.le.s32.totalorder 2, %s15
      // Predicated region
      $region49: #{tpu_custom_call.1} parent=5 // pred_check
        %p1322 = pneg %p1321
      $region50: #{tpu_custom_call.1} parent=5 // pred_check_branch
        %1324 = sbr.rel (%p1322) target = $region52
      $region51: #{tpu_custom_call.1} parent=5 // pred_region
        %s1325 = ssub.s32 %s15, 2
        // Predicated region
        $region53: #{tpu_custom_call.1} parent=51 // pred_check
          %p1326 = pneg %p185
        $region54: #{tpu_custom_call.1} parent=51 // pred_check_branch
          %1328 = sbr.rel (%p1326) target = $region56
        $region55: #{tpu_custom_call.1} parent=51 // pred_region
          %s1329 = sand.u32 %s170, 1
          %s1330 = scalar_lea.sflag [#allocation3], %s1329
          %s1331 = sand.u32 %s170, 1
          %s1332 = smul.addr %s1331, 32
          %s1333 = scalar_lea.vmem [#allocation2], %s1332
          %1334 = dma.done %s1330, 512
        $region56: #{tpu_custom_call.1} parent=51 // pred_fallthru
          _
      $region52: #{tpu_custom_call.1} parent=5 // pred_fallthru
        _
    $region6: #{tpu_custom_call.1} parent=1 // loop_footer
      %s19 = sadd.s32 1, %s15
    $region7: #{tpu_custom_call.1} parent=1 // loop_footer_branch
      %14 = sbr.rel target = $region3
    $region8: #{tpu_custom_call.1} parent=1 // loop_exit
      _
    %1335 = vsyncpa [#allocation3], 1
    %s1336 = scalar_lea.sflag [#allocation3], 1
    %1337 = vsyncpa %s1336, 1

</llo_original>
